<compile_context>
chip_gen: v6e
topology: v6e:2x2x1
jax: 0.10.0
libtpu: 0.0.40
codegen_flags: <defaults>
</compile_context>

<pallas_src>
import math

import jax
import jax.numpy as jnp
from jax import lax
from jax.experimental import pallas as pl
from jax.experimental.pallas import tpu as pltpu

LN_EPS = 1e-5  # torch.nn.LayerNorm default


def _layernorm(x, gamma, beta):
    mean = jnp.mean(x, axis=-1, keepdims=True)
    var = jnp.mean(jnp.square(x - mean), axis=-1, keepdims=True)  # biased, like torch
    return (x - mean) * lax.rsqrt(var + LN_EPS) * gamma + beta


def _gelu_exact(x):
    # torch nn.GELU() default = exact erf-based GELU
    return 0.5 * x * (1.0 + lax.erf(x * (1.0 / math.sqrt(2.0))))


# ----------------------- fused residual-block stack ------------------------- #
def _res_stack_kernel(x0_ref, bias_ref, w1x_ref, ln1_ref, w2_ref, ln2_ref,
                      xout_ref, h_ref, y_ref, xbf_ref):
    i = pl.program_id(0)          # residual block index (sequential)
    p = pl.program_id(1)          # phase: 0 = fill h, 1 = consume h
    k = pl.program_id(2)          # d4 tile index
    nk = pl.num_programs(2)
    tile = w1x_ref.shape[-1]
    off = pl.multiple_of(k * tile, 128)

    # Seed the carried hidden state (output block revisited across the grid).
    @pl.when((i == 0) & (p == 0) & (k == 0))
    def _():
        xout_ref[...] = x0_ref[...]

    # Once per block: refresh the bf16 view of the carried state (hoisted cast).
    @pl.when((p == 0) & (k == 0))
    def _():
        xbf_ref[...] = xout_ref[...].astype(jnp.bfloat16)

    # ---- phase 0: h[:, tile_k] = x @ W1x[:, tile_k] + precomputed cond. bias ----
    @pl.when(p == 0)
    def _():
        ht = jnp.dot(xbf_ref[...], w1x_ref[...], preferred_element_type=jnp.float32)
        h_ref[:, pl.ds(off, tile)] = ht + bias_ref[:, pl.ds(off, tile)]

    # ---- end of phase 0: LN1 + GELU on the full h scratch (f32), init y acc ----
    @pl.when((p == 0) & (k == nk - 1))
    def _():
        h = _layernorm(h_ref[...], ln1_ref[0:1, :], ln1_ref[1:2, :])
        h_ref[...] = _gelu_exact(h)
        y_ref[...] = jnp.zeros_like(y_ref)

    # ---- phase 1: y += gelu(h)[:, tile_k] @ W2[tile_k, :] ----
    @pl.when(p == 1)
    def _():
        ht = h_ref[:, pl.ds(off, tile)].astype(jnp.bfloat16)
        y_ref[...] += jnp.dot(ht, w2_ref[...], preferred_element_type=jnp.float32)

    # ---- end of phase 1: LN2 + residual into the carried state ----
    @pl.when((p == 1) & (k == nk - 1))
    def _():
        y = _layernorm(y_ref[...], ln2_ref[0:1, :], ln2_ref[1:2, :])
        xout_ref[...] = y + xout_ref[...]


# ------------------------- VMEM budget / tile selection --------------------- #
_WEIGHT_BUFS = 3          # pipeline depth requested for the streamed weight tiles
_VMEM_HEADROOM = 1.4      # slack over the analytic estimate
_VMEM_RESERVE = 12 << 20  # compiler-internal scratch / IO staging / semaphores


def _physical_vmem_bytes():
    try:
        info = pltpu.get_tpu_info()
        for name in ("vmem_capacity_bytes", "vmem_bytes", "vmem_size_bytes"):
            v = getattr(info, name, None)
            if v:
                return int(v)
    except Exception:
        pass
    return 64 << 20   # conservative fallback: smallest per-TC VMEM (v7x)


def _vmem_budget():
    phys = _physical_vmem_bytes()
    # ≈52 MiB on 64 MiB parts (v7x), ≈108 MiB on 128 MiB parts (v5e/v6e).
    return max(min(int(phys * 0.85), phys - _VMEM_RESERVE), 32 << 20)


def _vmem_estimate(B, c_hidden, d4, tile, weight_bufs):
    bf16, f32 = 2, 4
    w_tiles = (c_hidden * tile + tile * c_hidden) * bf16            # w1x + w2 tiles
    small = (B * d4 + 2 * d4 + 2 * c_hidden) * f32                  # bias, ln1, ln2
    resident = (2 * B * c_hidden * f32                              # x0 (2-buffered in)
                + 2 * B * c_hidden * f32                            # carried out block
                + B * d4 * f32 + B * c_hidden * f32                 # h, y scratch
                + B * c_hidden * bf16)                              # bf16 state scratch
    return weight_bufs * w_tiles + 2 * small + resident


def _pick_tile(B, c_hidden, d4, budget, weight_bufs):
    cands = [t for t in range(d4, 127, -128) if d4 % t == 0]        # multiples of 128
    for t in cands:
        need = int(_vmem_estimate(B, c_hidden, d4, t, weight_bufs) * _VMEM_HEADROOM)
        if need + (2 << 20) <= budget:
            return t
    return cands[-1] if cands else 128


def res_stack(x0, bias, w1x, ln1, w2, ln2, *, tile_d4=None):
    B, c_hidden = x0.shape
    n_blocks, _, d4 = w1x.shape
    assert d4 % 128 == 0, d4
    budget = _vmem_budget()
    if tile_d4 is None:
        tile_d4 = _pick_tile(B, c_hidden, d4, budget, _WEIGHT_BUFS)
    assert d4 % tile_d4 == 0 and tile_d4 % 128 == 0, (d4, tile_d4)
    nk = d4 // tile_d4

    rep = lambda i, p, k: (0, 0)                                    # shared by all steps
    # w1 tiles advance with k in phase 0, stay parked on the last tile in phase 1.
    w1_map = lambda i, p, k: (i, 0, k * (1 - p) + (nk - 1) * p)
    # w2 tiles park on tile 0 in phase 0 (prefetch), advance with k in phase 1.
    w2_map = lambda i, p, k: (i, k * p, 0)
    blk_map = lambda i, p, k: (i, 0, 0)                             # one DMA per block

    def call(weight_depth):
        wkw = {} if weight_depth is None else dict(pipeline_mode=pl.Buffered(weight_depth))
        in_specs = [
            pl.BlockSpec((B, c_hidden), rep),                       # x0 (f32)
            pl.BlockSpec((None, B, d4), blk_map),                   # cond. bias (f32)
            pl.BlockSpec((None, c_hidden, tile_d4), w1_map, **wkw), # w1 rows for x (bf16)
            pl.BlockSpec((None, 2, d4), blk_map),                   # LN1 [gamma; beta]
            pl.BlockSpec((None, tile_d4, c_hidden), w2_map, **wkw), # w2 (bf16)
            pl.BlockSpec((None, 2, c_hidden), blk_map),             # LN2 [gamma; beta]
        ]
        return pl.pallas_call(
            _res_stack_kernel,
            out_shape=jax.ShapeDtypeStruct((B, c_hidden), jnp.float32),
            grid=(n_blocks, 2, nk),
            in_specs=in_specs,
            out_specs=pl.BlockSpec((B, c_hidden), rep),             # carried hidden state
            scratch_shapes=[
                pltpu.VMEM((B, d4), jnp.float32),                   # h scratch
                pltpu.VMEM((B, c_hidden), jnp.float32),             # y accumulator
                pltpu.VMEM((B, c_hidden), jnp.bfloat16),            # bf16 carried state
            ],
            compiler_params=pltpu.CompilerParams(
                dimension_semantics=("arbitrary", "arbitrary", "arbitrary"),
                vmem_limit_bytes=int(budget)),
        )(x0, bias, w1x, ln1, w2, ln2)

    try:
        return call(_WEIGHT_BUFS)
    except Exception:
        # Fallback: default 2-deep pipelining if Buffered(n) is unsupported on
        # this jax/libtpu, or the extra buffer pushes past the VMEM budget.
        return call(None)


# ------------------------------- model glue --------------------------------- #
def gen_r_embedding(r, c_r, max_positions=10000):
    r = r * max_positions
    half = c_r // 2
    scale = math.log(max_positions) / (half - 1)
    freqs = jnp.exp(-scale * jnp.arange(half, dtype=jnp.float32))
    emb = r[:, None] * freqs[None, :]
    emb = jnp.concatenate([jnp.sin(emb), jnp.cos(emb)], axis=1)
    if c_r % 2 == 1:
        emb = jnp.pad(emb, ((0, 0), (0, 1)))
    return emb


def init_params(key, clip_r, c_hidden, c_r, num_blocks):
    d_in = clip_r + c_hidden + c_r
    d4 = 4 * c_hidden
    ks = jax.random.split(key, 9)

    def lin(k, fi, fo):
        return jax.random.normal(k, (fi, fo), jnp.float32) / math.sqrt(fi)

    params = {
        "w_in": lin(ks[0], clip_r, c_hidden),
        "b_in": (jax.random.uniform(ks[1], (c_hidden,), jnp.float32) - 0.5)
        / math.sqrt(clip_r),
        "w_out": lin(ks[2], c_hidden, clip_r),
        "b_out": (jax.random.uniform(ks[3], (clip_r,), jnp.float32) - 0.5)
        / math.sqrt(c_hidden),
    }

    w1_list, w2_list = [], []
    for bk in jax.random.split(ks[4], num_blocks):
        k1, k2 = jax.random.split(bk)
        # blocks[-1][0].weight.data *= sqrt(1/num_blocks)
        w1_list.append(lin(k1, d_in, d4) * math.sqrt(1.0 / num_blocks))
        w2_list.append(lin(k2, d4, c_hidden))
    w1 = jnp.stack(w1_list)                                   # (N, d_in, 4h) f32
    # torch forward concat order is [x | c | r_emb]; store block weights in bf16.
    params["w1x"] = w1[:, :c_hidden].astype(jnp.bfloat16)     # (N, h, 4h)
    params["w1cr"] = w1[:, c_hidden:].astype(jnp.bfloat16)    # (N, clip_r + c_r, 4h)
    params["w2"] = jnp.stack(w2_list).astype(jnp.bfloat16)    # (N, 4h, h)

    # Packed LayerNorm affine params [gamma; beta].  Perturbed from the torch
    # default (1, 0) so the affine path is actually exercised by the self-check.
    g1 = 1.0 + 0.05 * jax.random.normal(ks[5], (num_blocks, 1, d4), jnp.float32)
    b1 = 0.05 * jax.random.normal(ks[6], (num_blocks, 1, d4), jnp.float32)
    g2 = 1.0 + 0.05 * jax.random.normal(ks[7], (num_blocks, 1, c_hidden), jnp.float32)
    b2 = 0.05 * jax.random.normal(ks[8], (num_blocks, 1, c_hidden), jnp.float32)
    params["ln1"] = jnp.concatenate([g1, b1], axis=1)         # (N, 2, 4h)
    params["ln2"] = jnp.concatenate([g2, b2], axis=1)         # (N, 2, h)
    return params


def prior_forward(params, x, r, c, c_r, *, tile_d4=None):
    r_emb = gen_r_embedding(r, c_r)
    cr = jnp.concatenate([c, r_emb], axis=1).astype(jnp.bfloat16)
    # Conditioning contribution cat([c, r_emb]) @ W1[:, c_hidden:] for all blocks,
    # computed once by XLA into a tiny (N, B, 4h) f32 bias streamed per block.
    bias = jnp.einsum("bd,ndk->nbk", cr, params["w1cr"],
                      preferred_element_type=jnp.float32)
    # First / last Linear: tiny GEMMs, left to XLA (no pallas launch overhead).
    x0 = x @ params["w_in"] + params["b_in"]
    xn = res_stack(x0, bias, params["w1x"], params["ln1"], params["w2"],
                   params["ln2"], tile_d4=tile_d4)
    return xn @ params["w_out"] + params["b_out"]


def prior_forward_ref(params, x, r, c, c_r):
    """Pure-JAX reference mirroring the PyTorch forward semantics, using the
    same bf16 weight storage / mixed-precision matmuls (f32 accumulation) and
    f32 LayerNorm/GELU as the kernel."""
    r_emb = gen_r_embedding(r, c_r)
    cr = jnp.concatenate([c, r_emb], axis=1).astype(jnp.bfloat16)
    x = x @ params["w_in"] + params["b_in"]
    x_prev = x
    n = params["w1x"].shape[0]
    for i in range(n):
        h = jnp.dot(x.astype(jnp.bfloat16), params["w1x"][i],
                    preferred_element_type=jnp.float32)
        h += jnp.dot(cr, params["w1cr"][i], preferred_element_type=jnp.float32)
        h = _layernorm(h, params["ln1"][i, 0:1], params["ln1"][i, 1:2])
        h = _gelu_exact(h)
        y = jnp.dot(h.astype(jnp.bfloat16), params["w2"][i],
                    preferred_element_type=jnp.float32)
        y = _layernorm(y, params["ln2"][i, 0:1], params["ln2"][i, 1:2])
        x = y + x_prev
        x_prev = x
    return x @ params["w_out"] + params["b_out"]


if __name__ == "__main__":
    # Small shapes consistent with the module's forward (x, c: (B, clip_r); r: (B,))
    B, clip_r, c_hidden, c_r, num_blocks = 2, 64, 128, 16, 4

    key = jax.random.PRNGKey(0)
    kx, kr, kc, kp = jax.random.split(key, 4)
    x = jax.random.normal(kx, (B, clip_r), jnp.float32)
    r = jax.random.uniform(kr, (B,), jnp.float32)
    c = jax.random.normal(kc, (B, clip_r), jnp.float32)
    params = init_params(kp, clip_r, c_hidden, c_r, num_blocks)

    ref = prior_forward_ref(params, x, r, c, c_r)

    # 1) auto tile selection (nk=1 at toy shapes, exercises the single-tile path)
    out_auto = jax.block_until_ready(prior_forward(params, x, r, c, c_r))
    # 2) forced tile_d4=128 -> 4 d4-tiles per block, exercises the tiled two-phase path
    out_tiled = jax.block_until_ready(prior_forward(params, x, r, c, c_r, tile_d4=128))

    assert out_auto.shape == (B, clip_r) and out_tiled.shape == (B, clip_r)
    err_a = float(jnp.max(jnp.abs(out_auto - ref)))
    err_t = float(jnp.max(jnp.abs(out_tiled - ref)))
    assert jnp.allclose(out_auto, ref, rtol=1e-3, atol=1e-3), err_a
    assert jnp.allclose(out_tiled, ref, rtol=1e-3, atol=1e-3), err_t
    print("KERNEL_OK")
</pallas_src>

<mosaic_0001>
module attributes {stable_mosaic.version = 11 : i64} {
  func.func @_res_stack_kernel(%arg0: i32, %arg1: i32, %arg2: i32, %arg3: memref<2x128xf32, #tpu.memory_space<vmem>>, %arg4: memref<1x2x512xf32, #tpu.memory_space<vmem>>, %arg5: memref<1x128x512xbf16, #tpu.memory_space<vmem>>, %arg6: memref<1x2x512xf32, #tpu.memory_space<vmem>>, %arg7: memref<1x512x128xbf16, #tpu.memory_space<vmem>>, %arg8: memref<1x2x128xf32, #tpu.memory_space<vmem>>, %arg9: memref<2x128xf32, #tpu.memory_space<vmem>>, %arg10: memref<2x512xf32, #tpu.memory_space<vmem>>, %arg11: memref<2x128xf32, #tpu.memory_space<vmem>>, %arg12: memref<2x128xbf16, #tpu.memory_space<vmem>>) attributes {dimension_semantics = [#tpu.dimension_semantics<arbitrary>, #tpu.dimension_semantics<arbitrary>, #tpu.dimension_semantics<arbitrary>], iteration_bounds = array<i64: 4, 2, 1>, scalar_prefetch = 0 : i64, scratch_operands = 3 : i64, tpu.core_type = #tpu.core_type<tc>, window_params = [{pipeline_mode = #tpu.pipeline_mode<synchronous>, transform_indices = @transform_0, window_bounds = array<i64: 2, 128>}, {transform_indices = @transform_1, window_bounds = array<i64: 1, 2, 512>}, {transform_indices = @transform_2, window_bounds = array<i64: 1, 128, 512>}, {transform_indices = @transform_3, window_bounds = array<i64: 1, 2, 512>}, {transform_indices = @transform_4, window_bounds = array<i64: 1, 512, 128>}, {transform_indices = @transform_5, window_bounds = array<i64: 1, 2, 128>}, {pipeline_mode = #tpu.pipeline_mode<synchronous>, transform_indices = @transform_6, window_bounds = array<i64: 2, 128>}]} {
    %c512_i32 = arith.constant 512 : i32
    %0 = arith.muli %arg2, %c512_i32 : i32
    %1 = tpu.assume_multiple %0, 128 : i32
    %c0_i32 = arith.constant 0 : i32
    %2 = arith.cmpi eq, %arg0, %c0_i32 : i32
    %c0_i32_0 = arith.constant 0 : i32
    %3 = arith.cmpi eq, %arg1, %c0_i32_0 : i32
    %4 = arith.andi %2, %3 : i1
    %c0_i32_1 = arith.constant 0 : i32
    %5 = arith.cmpi eq, %arg2, %c0_i32_1 : i32
    %6 = arith.andi %4, %5 : i1
    %7 = arith.extui %6 : i1 to i32
    %c0_i32_2 = arith.constant 0 : i32
    %8 = arith.cmpi ne, %7, %c0_i32_2 : i32
    scf.if %8 {
      %c0 = arith.constant 0 : index
      %c0_15 = arith.constant 0 : index
      %30 = vector.load %arg3[%c0, %c0_15] : memref<2x128xf32, #tpu.memory_space<vmem>>, vector<2x128xf32>
      %c0_16 = arith.constant 0 : index
      %c0_17 = arith.constant 0 : index
      %31 = vector.load %arg9[%c0_16, %c0_17] : memref<2x128xf32, #tpu.memory_space<vmem>>, vector<2x128xf32>
      tpu.vector_store %arg9[%c0_16, %c0_17], %30 {strides = array<i32>} : memref<2x128xf32, #tpu.memory_space<vmem>>, vector<2x128xf32>,
    } else {
    }
    %c0_i32_3 = arith.constant 0 : i32
    %9 = arith.cmpi eq, %arg1, %c0_i32_3 : i32
    %c0_i32_4 = arith.constant 0 : i32
    %10 = arith.cmpi eq, %arg2, %c0_i32_4 : i32
    %11 = arith.andi %9, %10 : i1
    %12 = arith.extui %11 : i1 to i32
    %c0_i32_5 = arith.constant 0 : i32
    %13 = arith.cmpi ne, %12, %c0_i32_5 : i32
    scf.if %13 {
      %c0 = arith.constant 0 : index
      %c0_15 = arith.constant 0 : index
      %30 = vector.load %arg9[%c0, %c0_15] : memref<2x128xf32, #tpu.memory_space<vmem>>, vector<2x128xf32>
      %31 = arith.truncf %30 : vector<2x128xf32> to vector<2x128xbf16>
      %c0_16 = arith.constant 0 : index
      %c0_17 = arith.constant 0 : index
      %32 = vector.load %arg12[%c0_16, %c0_17] : memref<2x128xbf16, #tpu.memory_space<vmem>>, vector<2x128xbf16>
      tpu.vector_store %arg12[%c0_16, %c0_17], %31 {strides = array<i32>} : memref<2x128xbf16, #tpu.memory_space<vmem>>, vector<2x128xbf16>,
    } else {
    }
    %c0_i32_6 = arith.constant 0 : i32
    %14 = arith.cmpi eq, %arg1, %c0_i32_6 : i32
    %15 = arith.extui %14 : i1 to i32
    %c0_i32_7 = arith.constant 0 : i32
    %16 = arith.cmpi ne, %15, %c0_i32_7 : i32
    scf.if %16 {
      %c0 = arith.constant 0 : index
      %c0_15 = arith.constant 0 : index
      %30 = vector.load %arg12[%c0, %c0_15] : memref<2x128xbf16, #tpu.memory_space<vmem>>, vector<2x128xbf16>
      %c0_16 = arith.constant 0 : index
      %c0_17 = arith.constant 0 : index
      %c0_18 = arith.constant 0 : index
      %31 = vector.load %arg5[%c0_16, %c0_17, %c0_18] : memref<1x128x512xbf16, #tpu.memory_space<vmem>>, vector<1x128x512xbf16>
      %32 = vector.shape_cast %31 : vector<1x128x512xbf16> to vector<128x512xbf16>
      %cst = arith.constant dense<0.000000e+00> : vector<2x512xf32>
      %33 = tpu.matmul %30, %32, %cst {dimension_numbers = #tpu.dot_dimension_numbers<[1], [0], [0], [1], [0, 0, 1, 1], [], []>} : vector<2x128xbf16>, vector<128x512xbf16>, vector<2x512xf32> -> vector<2x512xf32>
      %c0_19 = arith.constant 0 : index
      %c0_20 = arith.constant 0 : index
      %34 = arith.index_cast %1 : i32 to index
      %35 = vector.load %arg4[%c0_19, %c0_20, %34] : memref<1x2x512xf32, #tpu.memory_space<vmem>>, vector<1x2x512xf32>
      %36 = vector.shape_cast %35 : vector<1x2x512xf32> to vector<2x512xf32>
      %37 = arith.addf %33, %36 : vector<2x512xf32>
      %c0_21 = arith.constant 0 : index
      %38 = arith.index_cast %1 : i32 to index
      %39 = vector.load %arg10[%c0_21, %38] : memref<2x512xf32, #tpu.memory_space<vmem>>, vector<2x512xf32>
      tpu.vector_store %arg10[%c0_21, %38], %37 {strides = array<i32>} : memref<2x512xf32, #tpu.memory_space<vmem>>, vector<2x512xf32>,
    } else {
    }
    %c0_i32_8 = arith.constant 0 : i32
    %17 = arith.cmpi eq, %arg1, %c0_i32_8 : i32
    %c0_i32_9 = arith.constant 0 : i32
    %18 = arith.cmpi eq, %arg2, %c0_i32_9 : i32
    %19 = arith.andi %17, %18 : i1
    %20 = arith.extui %19 : i1 to i32
    %c0_i32_10 = arith.constant 0 : i32
    %21 = arith.cmpi ne, %20, %c0_i32_10 : i32
    scf.if %21 {
      %c0 = arith.constant 0 : index
      %c0_15 = arith.constant 0 : index
      %30 = vector.load %arg10[%c0, %c0_15] : memref<2x512xf32, #tpu.memory_space<vmem>>, vector<2x512xf32>
      %c0_16 = arith.constant 0 : index
      %c0_17 = arith.constant 0 : index
      %c0_18 = arith.constant 0 : index
      %31 = vector.load %arg6[%c0_16, %c0_17, %c0_18] : memref<1x2x512xf32, #tpu.memory_space<vmem>>, vector<1x1x512xf32>
      %32 = vector.shape_cast %31 : vector<1x1x512xf32> to vector<1x512xf32>
      %c0_19 = arith.constant 0 : index
      %c1 = arith.constant 1 : index
      %c0_20 = arith.constant 0 : index
      %33 = vector.load %arg6[%c0_19, %c1, %c0_20] : memref<1x2x512xf32, #tpu.memory_space<vmem>>, vector<1x1x512xf32>
      %34 = vector.shape_cast %33 : vector<1x1x512xf32> to vector<1x512xf32>
      %cst = arith.constant dense<0.000000e+00> : vector<2xf32>
      %35 = vector.multi_reduction <add>, %30, %cst [1] : vector<2x512xf32> to vector<2xf32>
      %36 = vector.shape_cast %35 : vector<2xf32> to vector<2x1xf32>
      %cst_21 = arith.constant 5.120000e+02 : f32
      %37 = vector.broadcast %cst_21 : f32 to vector<2x1xf32>
      %38 = arith.divf %36, %37 : vector<2x1xf32>
      %39 = vector.broadcast %38 : vector<2x1xf32> to vector<2x512xf32>
      %40 = arith.subf %30, %39 : vector<2x512xf32>
      %41 = arith.mulf %40, %40 : vector<2x512xf32>
      %cst_22 = arith.constant dense<0.000000e+00> : vector<2xf32>
      %42 = vector.multi_reduction <add>, %41, %cst_22 [1] : vector<2x512xf32> to vector<2xf32>
      %43 = vector.shape_cast %42 : vector<2xf32> to vector<2x1xf32>
      %cst_23 = arith.constant 5.120000e+02 : f32
      %44 = vector.broadcast %cst_23 : f32 to vector<2x1xf32>
      %45 = arith.divf %43, %44 : vector<2x1xf32>
      %46 = vector.broadcast %38 : vector<2x1xf32> to vector<2x512xf32>
      %47 = arith.subf %30, %46 : vector<2x512xf32>
      %cst_24 = arith.constant 9.99999974E-6 : f32
      %48 = vector.broadcast %cst_24 : f32 to vector<2x1xf32>
      %49 = arith.addf %45, %48 : vector<2x1xf32>
      %50 = math.rsqrt %49 : vector<2x1xf32>
      %51 = vector.broadcast %50 : vector<2x1xf32> to vector<2x512xf32>
      %52 = arith.mulf %47, %51 : vector<2x512xf32>
      %53 = vector.broadcast %32 : vector<1x512xf32> to vector<2x512xf32>
      %54 = arith.mulf %52, %53 : vector<2x512xf32>
      %55 = vector.broadcast %34 : vector<1x512xf32> to vector<2x512xf32>
      %56 = arith.addf %54, %55 : vector<2x512xf32>
      %cst_25 = arith.constant 5.000000e-01 : f32
      %57 = vector.broadcast %cst_25 : f32 to vector<2x512xf32>
      %58 = arith.mulf %57, %56 : vector<2x512xf32>
      %cst_26 = arith.constant 0.707106769 : f32
      %59 = vector.broadcast %cst_26 : f32 to vector<2x512xf32>
      %60 = arith.mulf %56, %59 : vector<2x512xf32>
      %61 = math.erf %60 : vector<2x512xf32>
      %cst_27 = arith.constant 1.000000e+00 : f32
      %62 = vector.broadcast %cst_27 : f32 to vector<2x512xf32>
      %63 = arith.addf %62, %61 : vector<2x512xf32>
      %64 = arith.mulf %58, %63 : vector<2x512xf32>
      %c0_28 = arith.constant 0 : index
      %c0_29 = arith.constant 0 : index
      %65 = vector.load %arg10[%c0_28, %c0_29] : memref<2x512xf32, #tpu.memory_space<vmem>>, vector<2x512xf32>
      tpu.vector_store %arg10[%c0_28, %c0_29], %64 {strides = array<i32>} : memref<2x512xf32, #tpu.memory_space<vmem>>, vector<2x512xf32>,
      %cst_30 = arith.constant 0.000000e+00 : f32
      %66 = vector.broadcast %cst_30 : f32 to vector<2x128xf32>
      %c0_31 = arith.constant 0 : index
      %c0_32 = arith.constant 0 : index
      %67 = vector.load %arg11[%c0_31, %c0_32] : memref<2x128xf32, #tpu.memory_space<vmem>>, vector<2x128xf32>
      tpu.vector_store %arg11[%c0_31, %c0_32], %66 {strides = array<i32>} : memref<2x128xf32, #tpu.memory_space<vmem>>, vector<2x128xf32>,
    } else {
    }
    %c1_i32 = arith.constant 1 : i32
    %22 = arith.cmpi eq, %arg1, %c1_i32 : i32
    %23 = arith.extui %22 : i1 to i32
    %c0_i32_11 = arith.constant 0 : i32
    %24 = arith.cmpi ne, %23, %c0_i32_11 : i32
    scf.if %24 {
      %c0 = arith.constant 0 : index
      %30 = arith.index_cast %1 : i32 to index
      %31 = vector.load %arg10[%c0, %30] : memref<2x512xf32, #tpu.memory_space<vmem>>, vector<2x512xf32>
      %32 = arith.truncf %31 : vector<2x512xf32> to vector<2x512xbf16>
      %c0_15 = arith.constant 0 : index
      %c0_16 = arith.constant 0 : index
      %33 = vector.load %arg11[%c0_15, %c0_16] : memref<2x128xf32, #tpu.memory_space<vmem>>, vector<2x128xf32>
      %c0_17 = arith.constant 0 : index
      %c0_18 = arith.constant 0 : index
      %c0_19 = arith.constant 0 : index
      %34 = vector.load %arg7[%c0_17, %c0_18, %c0_19] : memref<1x512x128xbf16, #tpu.memory_space<vmem>>, vector<1x512x128xbf16>
      %35 = vector.shape_cast %34 : vector<1x512x128xbf16> to vector<512x128xbf16>
      %cst = arith.constant dense<0.000000e+00> : vector<2x128xf32>
      %36 = tpu.matmul %32, %35, %cst {dimension_numbers = #tpu.dot_dimension_numbers<[1], [0], [0], [1], [0, 0, 1, 1], [], []>} : vector<2x512xbf16>, vector<512x128xbf16>, vector<2x128xf32> -> vector<2x128xf32>
      %37 = arith.addf %33, %36 : vector<2x128xf32>
      %c0_20 = arith.constant 0 : index
      %c0_21 = arith.constant 0 : index
      %38 = vector.load %arg11[%c0_20, %c0_21] : memref<2x128xf32, #tpu.memory_space<vmem>>, vector<2x128xf32>
      tpu.vector_store %arg11[%c0_20, %c0_21], %37 {strides = array<i32>} : memref<2x128xf32, #tpu.memory_space<vmem>>, vector<2x128xf32>,
    } else {
    }
    %c1_i32_12 = arith.constant 1 : i32
    %25 = arith.cmpi eq, %arg1, %c1_i32_12 : i32
    %c0_i32_13 = arith.constant 0 : i32
    %26 = arith.cmpi eq, %arg2, %c0_i32_13 : i32
    %27 = arith.andi %25, %26 : i1
    %28 = arith.extui %27 : i1 to i32
    %c0_i32_14 = arith.constant 0 : i32
    %29 = arith.cmpi ne, %28, %c0_i32_14 : i32
    scf.if %29 {
      %c0 = arith.constant 0 : index
      %c0_15 = arith.constant 0 : index
      %30 = vector.load %arg11[%c0, %c0_15] : memref<2x128xf32, #tpu.memory_space<vmem>>, vector<2x128xf32>
      %c0_16 = arith.constant 0 : index
      %c0_17 = arith.constant 0 : index
      %c0_18 = arith.constant 0 : index
      %31 = vector.load %arg8[%c0_16, %c0_17, %c0_18] : memref<1x2x128xf32, #tpu.memory_space<vmem>>, vector<1x1x128xf32>
      %32 = vector.shape_cast %31 : vector<1x1x128xf32> to vector<1x128xf32>
      %c0_19 = arith.constant 0 : index
      %c1 = arith.constant 1 : index
      %c0_20 = arith.constant 0 : index
      %33 = vector.load %arg8[%c0_19, %c1, %c0_20] : memref<1x2x128xf32, #tpu.memory_space<vmem>>, vector<1x1x128xf32>
      %34 = vector.shape_cast %33 : vector<1x1x128xf32> to vector<1x128xf32>
      %cst = arith.constant dense<0.000000e+00> : vector<2xf32>
      %35 = vector.multi_reduction <add>, %30, %cst [1] : vector<2x128xf32> to vector<2xf32>
      %36 = vector.shape_cast %35 : vector<2xf32> to vector<2x1xf32>
      %cst_21 = arith.constant 1.280000e+02 : f32
      %37 = vector.broadcast %cst_21 : f32 to vector<2x1xf32>
      %38 = arith.divf %36, %37 : vector<2x1xf32>
      %39 = vector.broadcast %38 : vector<2x1xf32> to vector<2x128xf32>
      %40 = arith.subf %30, %39 : vector<2x128xf32>
      %41 = arith.mulf %40, %40 : vector<2x128xf32>
      %cst_22 = arith.constant dense<0.000000e+00> : vector<2xf32>
      %42 = vector.multi_reduction <add>, %41, %cst_22 [1] : vector<2x128xf32> to vector<2xf32>
      %43 = vector.shape_cast %42 : vector<2xf32> to vector<2x1xf32>
      %cst_23 = arith.constant 1.280000e+02 : f32
      %44 = vector.broadcast %cst_23 : f32 to vector<2x1xf32>
      %45 = arith.divf %43, %44 : vector<2x1xf32>
      %46 = vector.broadcast %38 : vector<2x1xf32> to vector<2x128xf32>
      %47 = arith.subf %30, %46 : vector<2x128xf32>
      %cst_24 = arith.constant 9.99999974E-6 : f32
      %48 = vector.broadcast %cst_24 : f32 to vector<2x1xf32>
      %49 = arith.addf %45, %48 : vector<2x1xf32>
      %50 = math.rsqrt %49 : vector<2x1xf32>
      %51 = vector.broadcast %50 : vector<2x1xf32> to vector<2x128xf32>
      %52 = arith.mulf %47, %51 : vector<2x128xf32>
      %53 = vector.broadcast %32 : vector<1x128xf32> to vector<2x128xf32>
      %54 = arith.mulf %52, %53 : vector<2x128xf32>
      %55 = vector.broadcast %34 : vector<1x128xf32> to vector<2x128xf32>
      %56 = arith.addf %54, %55 : vector<2x128xf32>
      %c0_25 = arith.constant 0 : index
      %c0_26 = arith.constant 0 : index
      %57 = vector.load %arg9[%c0_25, %c0_26] : memref<2x128xf32, #tpu.memory_space<vmem>>, vector<2x128xf32>
      %58 = arith.addf %56, %57 : vector<2x128xf32>
      %c0_27 = arith.constant 0 : index
      %c0_28 = arith.constant 0 : index
      %59 = vector.load %arg9[%c0_27, %c0_28] : memref<2x128xf32, #tpu.memory_space<vmem>>, vector<2x128xf32>
      tpu.vector_store %arg9[%c0_27, %c0_28], %58 {strides = array<i32>} : memref<2x128xf32, #tpu.memory_space<vmem>>, vector<2x128xf32>,
    } else {
    }
    return
  }
  func.func @transform_0(%arg0: i32, %arg1: i32, %arg2: i32) -> (i32, i32) {
    %c0_i32 = arith.constant 0 : i32
    %c0_i32_0 = arith.constant 0 : i32
    %c0_i32_1 = arith.constant 0 : i32
    return %c0_i32, %c0_i32_0 : i32, i32
  }
  func.func @transform_1(%arg0: i32, %arg1: i32, %arg2: i32) -> (i32, i32, i32) {
    %c0_i32 = arith.constant 0 : i32
    %c0_i32_0 = arith.constant 0 : i32
    %c0_i32_1 = arith.constant 0 : i32
    return %arg0, %c0_i32, %c0_i32_0 : i32, i32, i32
  }
  func.func @transform_2(%arg0: i32, %arg1: i32, %arg2: i32) -> (i32, i32, i32) {
    %c1_i32 = arith.constant 1 : i32
    %0 = arith.subi %c1_i32, %arg1 : i32
    %1 = arith.muli %arg2, %0 : i32
    %c0_i32 = arith.constant 0 : i32
    %2 = arith.muli %c0_i32, %arg1 : i32
    %3 = arith.addi %1, %2 : i32
    %c0_i32_0 = arith.constant 0 : i32
    %c0_i32_1 = arith.constant 0 : i32
    return %arg0, %c0_i32_0, %3 : i32, i32, i32
  }
  func.func @transform_3(%arg0: i32, %arg1: i32, %arg2: i32) -> (i32, i32, i32) {
    %c0_i32 = arith.constant 0 : i32
    %c0_i32_0 = arith.constant 0 : i32
    %c0_i32_1 = arith.constant 0 : i32
    return %arg0, %c0_i32, %c0_i32_0 : i32, i32, i32
  }
  func.func @transform_4(%arg0: i32, %arg1: i32, %arg2: i32) -> (i32, i32, i32) {
    %0 = arith.muli %arg2, %arg1 : i32
    %c0_i32 = arith.constant 0 : i32
    %c0_i32_0 = arith.constant 0 : i32
    return %arg0, %0, %c0_i32 : i32, i32, i32
  }
  func.func @transform_5(%arg0: i32, %arg1: i32, %arg2: i32) -> (i32, i32, i32) {
    %c0_i32 = arith.constant 0 : i32
    %c0_i32_0 = arith.constant 0 : i32
    %c0_i32_1 = arith.constant 0 : i32
    return %arg0, %c0_i32, %c0_i32_0 : i32, i32, i32
  }
  func.func @transform_6(%arg0: i32, %arg1: i32, %arg2: i32) -> (i32, i32) {
    %c0_i32 = arith.constant 0 : i32
    %c0_i32_0 = arith.constant 0 : i32
    %c0_i32_1 = arith.constant 0 : i32
    return %c0_i32, %c0_i32_0 : i32, i32
  }
}

</mosaic_0001>

<llo_original>
// kernel: tpu_custom_call.1
$region0: #{tpu_custom_call.1}
  #allocation0 [shape = 'u32[]', space=smem, size = 0x4, offset = 0x4, fixed_abs, tag = 'smem constant byte address 0x4 - core index']
  #allocation1 [shape = 'u32[144,128]{1,0:T(1,128)}', space=vmem, size = 0x12000, scoped, tag = 'internal scratch']
  #allocation2 [shape = 'f32[2,512]{1,0:T(2,128)}', space=vmem, size = 0x1000, scoped, tag = 'scratch operand']
  #allocation3 [shape = 'f32[2,128]{1,0:T(2,128)}', space=vmem, size = 0x400, scoped, tag = 'scratch operand']
  #allocation4 [shape = 'bf16[2,128]{1,0:T(2,128)(2,1)}', space=vmem, size = 0x200, scoped, tag = 'scratch operand']
  %s0 = inlined_call_operand.hbm [shape: f32[2,128], index: 0, kind: input, shape index: {}]
  %s1 = inlined_call_operand.hbm [shape: f32[4,2,512], index: 1, kind: input, shape index: {}]
  %s2 = inlined_call_operand.hbm [shape: bf16[4,128,512], index: 2, kind: input, shape index: {}]
  %s3 = inlined_call_operand.hbm [shape: f32[4,2,512], index: 3, kind: input, shape index: {}]
  %s4 = inlined_call_operand.hbm [shape: bf16[4,512,128], index: 4, kind: input, shape index: {}]
  %s5 = inlined_call_operand.vmem [shape: f32[4,2,128], index: 5, kind: input, shape index: {}]
  %s6 = inlined_call_operand.hbm [shape: f32[2,128], index: 6, kind: output, shape index: {}]
  %s7 = sld [smem:[#allocation0]]
  $region101: #{tpu_custom_call.1} parent=0
    _
  %s9 = ssub.s32 1, %s7
  %s10 = scalar_select 0, %s9, %s7
  $region1: #{tpu_custom_call.1} parent=0
    #allocation5 [shape = 'u8[1024]{0}', space=vmem, size = 0x400, scoped, tag = 'input window, operand 0, single buffered']
    #allocation6 [shape = 's32[2]{0}', space=sflag, size = 0x8, scoped, tag = 'scoped memory for tpu_custom_call.1']
    #allocation7 [shape = 's32[2]{0}', space=sflag, size = 0x8, scoped, tag = 'scoped memory for tpu_custom_call.1']
    #allocation8 [shape = 'u8[8192]{0}', space=vmem, size = 0x2000, scoped, tag = 'input window, operand 1']
    #allocation9 [shape = 's32[2]{0}', space=sflag, size = 0x8, scoped, tag = 'scoped memory for tpu_custom_call.1']
    #allocation10 [shape = 'u8[262144]{0}', space=vmem, size = 0x40000, scoped, tag = 'input window, operand 2']
    #allocation11 [shape = 'u8[8192]{0}', space=vmem, size = 0x2000, scoped, tag = 'input window, operand 3']
    #allocation12 [shape = 's32[2]{0}', space=sflag, size = 0x8, scoped, tag = 'scoped memory for tpu_custom_call.1']
    #allocation13 [shape = 'u8[262144]{0}', space=vmem, size = 0x40000, scoped, tag = 'input window, operand 4']
    #allocation14 [shape = 'u8[1024]{0}', space=vmem, size = 0x400, scoped, tag = 'output window, operand 0, single buffered']
    %11 = vsyncpa [#allocation6], 0
    %12 = vsyncpa [#allocation9], 0
    %s13 = scalar_lea.sflag [#allocation9], 1
    %14 = vsyncpa %s13, 0
    %15 = vsyncpa [#allocation12], 0
    %s16 = scalar_lea.sflag [#allocation12], 1
    %17 = vsyncpa %s16, 0
    %18 = vsyncpa [#allocation7], 0
    loop: start=0, step=1, limit=10
    $region2: #{tpu_custom_call.1} parent=1 // loop_pre_header
      _
    $region3: #{tpu_custom_call.1} parent=1 // loop_header
      %s20 = sphi 0, %s24
      %p21 = scmp.ge.s32.totalorder %s20, 10
      %s27 = sphi 0, %s46
      %s28 = sphi 0, %s42
      %s29 = sphi 0, %s38
      %s30 = sphi 0, %s27
      %s31 = sphi 0, %s28
      %s32 = sphi 0, %s29
      %s33 = sphi 0, %s30
      %s34 = sphi 0, %s31
      %s35 = sphi 0, %s32
      %s47 = sphi 0, %s47
      %s49 = sphi 0, %s47
      %s50 = sphi 0, %s49
      %s64 = sphi 0, %s50
      %s70 = sphi 0, %s72
      %s73 = sphi 0, %s70
      %s74 = sphi 0, %s73
      %s90 = sphi 0, %s74
      %s102 = sphi 0, %s104
      %s105 = sphi 0, %s102
      %s106 = sphi 0, %s105
      %s122 = sphi 0, %s106
      %s128 = sphi 0, %s130
      %s131 = sphi 0, %s128
      %s132 = sphi 0, %s131
      %s148 = sphi 0, %s132
      %s158 = sphi 0, %s160
      %s161 = sphi 0, %s158
      %s162 = sphi 0, %s161
      %s178 = sphi 0, %s162
      %s184 = sphi 0, %s186
      %s187 = sphi 0, %s184
      %s188 = sphi 0, %s187
      %s204 = sphi 0, %s188
      %s208 = sphi 0, %s208
      %s210 = sphi 0, %s208
      %s211 = sphi 0, %s210
      %s225 = sphi 0, %s211
    $region4: #{tpu_custom_call.1} parent=1 // loop_header_branch
      %23 = sbr.rel (%p21) target = $region8
    $region5: #{tpu_custom_call.1} parent=1 // loop_body
      %s25 = ssub.s32 %s20, 1
      %s26 = ssub.s32 %s20, 2
      %s36 = sadd.s32 1, %s29
      %p37 = scmp.ge.s32.totalorder %s36, 1
      %s38 = scalar_select %p37, 0, %s36
      %s39 = sadd.s32 1, %s28
      %s40 = scalar_select %p37, %s39, %s28
      %p41 = scmp.ge.s32.totalorder %s40, 2
      %s42 = scalar_select %p41, 0, %s40
      %s43 = sadd.s32 1, %s27
      %s44 = scalar_select %p41, %s43, %s27
      %p45 = scmp.ge.s32.totalorder %s44, 4
      %s46 = scalar_select %p45, 0, %s44
      %s48 = sadd.s32 %s47, 1
      %p51 = scmp.eq.s32.totalorder %s20, 7
      %p52 = scmp.ne.s32.totalorder %s47, %s49
      %p53 = scmp.eq.s32.totalorder %s20, 0
      %p54 = por %p52, %p53
      %p55 = scmp.ne.s32.totalorder %s47, %s49
      %p56 = scmp.eq.s32.totalorder %s25, 7
      %p57 = por %p55, %p56
      %p58 = scmp.ne.s32.totalorder %s49, %s50
      %p59 = scmp.eq.s32.totalorder %s25, 0
      %p60 = por %p58, %p59
      %p61 = scmp.ne.s32.totalorder %s49, %s50
      %p62 = scmp.eq.s32.totalorder %s26, 7
      %p63 = por %p61, %p62
      %p65 = scmp.ne.s32.totalorder %s50, %s64
      %p66 = scmp.eq.s32.totalorder %s26, 0
      %p67 = por %p65, %p66
      %s68 = ssub.s32 %s27, %s46
      %p69 = scmp.eq.s32.totalorder %s68, 0
      %s71 = sadd.s32 %s70, 1
      %s72 = scalar_select %p69, %s70, %s71
      %p75 = pneg %p69
      %p76 = scmp.eq.s32.totalorder %s20, 7
      %p77 = por %p75, %p76
      %p78 = scmp.ne.s32.totalorder %s70, %s73
      %p79 = scmp.eq.s32.totalorder %s20, 0
      %p80 = por %p78, %p79
      %p81 = scmp.ne.s32.totalorder %s70, %s73
      %p82 = scmp.eq.s32.totalorder %s25, 7
      %p83 = por %p81, %p82
      %p84 = scmp.ne.s32.totalorder %s73, %s74
      %p85 = scmp.eq.s32.totalorder %s25, 0
      %p86 = por %p84, %p85
      %p87 = scmp.ne.s32.totalorder %s73, %s74
      %p88 = scmp.eq.s32.totalorder %s26, 7
      %p89 = por %p87, %p88
      %p91 = scmp.ne.s32.totalorder %s74, %s90
      %p92 = scmp.eq.s32.totalorder %s26, 0
      %p93 = por %p91, %p92
      %s94 = ssub.s32 1, %s28
      %s95 = smul.u32 %s29, %s94
      %s96 = ssub.s32 1, %s42
      %s97 = smul.u32 %s38, %s96
      %s98 = ssub.s32 %s27, %s46
      %s99 = ssub.s32 %s95, %s97
      %s100 = sor.u32 %s98, %s99
      %p101 = scmp.eq.s32.totalorder %s100, 0
      %s103 = sadd.s32 %s102, 1
      %s104 = scalar_select %p101, %s102, %s103
      %p107 = pneg %p101
      %p108 = scmp.eq.s32.totalorder %s20, 7
      %p109 = por %p107, %p108
      %p110 = scmp.ne.s32.totalorder %s102, %s105
      %p111 = scmp.eq.s32.totalorder %s20, 0
      %p112 = por %p110, %p111
      %p113 = scmp.ne.s32.totalorder %s102, %s105
      %p114 = scmp.eq.s32.totalorder %s25, 7
      %p115 = por %p113, %p114
      %p116 = scmp.ne.s32.totalorder %s105, %s106
      %p117 = scmp.eq.s32.totalorder %s25, 0
      %p118 = por %p116, %p117
      %p119 = scmp.ne.s32.totalorder %s105, %s106
      %p120 = scmp.eq.s32.totalorder %s26, 7
      %p121 = por %p119, %p120
      %p123 = scmp.ne.s32.totalorder %s106, %s122
      %p124 = scmp.eq.s32.totalorder %s26, 0
      %p125 = por %p123, %p124
      %s126 = ssub.s32 %s27, %s46
      %p127 = scmp.eq.s32.totalorder %s126, 0
      %s129 = sadd.s32 %s128, 1
      %s130 = scalar_select %p127, %s128, %s129
      %p133 = pneg %p127
      %p134 = scmp.eq.s32.totalorder %s20, 7
      %p135 = por %p133, %p134
      %p136 = scmp.ne.s32.totalorder %s128, %s131
      %p137 = scmp.eq.s32.totalorder %s20, 0
      %p138 = por %p136, %p137
      %p139 = scmp.ne.s32.totalorder %s128, %s131
      %p140 = scmp.eq.s32.totalorder %s25, 7
      %p141 = por %p139, %p140
      %p142 = scmp.ne.s32.totalorder %s131, %s132
      %p143 = scmp.eq.s32.totalorder %s25, 0
      %p144 = por %p142, %p143
      %p145 = scmp.ne.s32.totalorder %s131, %s132
      %p146 = scmp.eq.s32.totalorder %s26, 7
      %p147 = por %p145, %p146
      %p149 = scmp.ne.s32.totalorder %s132, %s148
      %p150 = scmp.eq.s32.totalorder %s26, 0
      %p151 = por %p149, %p150
      %s152 = smul.u32 %s29, %s28
      %s153 = smul.u32 %s38, %s42
      %s154 = ssub.s32 %s27, %s46
      %s155 = ssub.s32 %s152, %s153
      %s156 = sor.u32 %s154, %s155
      %p157 = scmp.eq.s32.totalorder %s156, 0
      %s159 = sadd.s32 %s158, 1
      %s160 = scalar_select %p157, %s158, %s159
      %p163 = pneg %p157
      %p164 = scmp.eq.s32.totalorder %s20, 7
      %p165 = por %p163, %p164
      %p166 = scmp.ne.s32.totalorder %s158, %s161
      %p167 = scmp.eq.s32.totalorder %s20, 0
      %p168 = por %p166, %p167
      %p169 = scmp.ne.s32.totalorder %s158, %s161
      %p170 = scmp.eq.s32.totalorder %s25, 7
      %p171 = por %p169, %p170
      %p172 = scmp.ne.s32.totalorder %s161, %s162
      %p173 = scmp.eq.s32.totalorder %s25, 0
      %p174 = por %p172, %p173
      %p175 = scmp.ne.s32.totalorder %s161, %s162
      %p176 = scmp.eq.s32.totalorder %s26, 7
      %p177 = por %p175, %p176
      %p179 = scmp.ne.s32.totalorder %s162, %s178
      %p180 = scmp.eq.s32.totalorder %s26, 0
      %p181 = por %p179, %p180
      %s182 = ssub.s32 %s27, %s46
      %p183 = scmp.eq.s32.totalorder %s182, 0
      %s185 = sadd.s32 %s184, 1
      %s186 = scalar_select %p183, %s184, %s185
      %p189 = pneg %p183
      %p190 = scmp.eq.s32.totalorder %s20, 7
      %p191 = por %p189, %p190
      %p192 = scmp.ne.s32.totalorder %s184, %s187
      %p193 = scmp.eq.s32.totalorder %s20, 0
      %p194 = por %p192, %p193
      %p195 = scmp.ne.s32.totalorder %s184, %s187
      %p196 = scmp.eq.s32.totalorder %s25, 7
      %p197 = por %p195, %p196
      %p198 = scmp.ne.s32.totalorder %s187, %s188
      %p199 = scmp.eq.s32.totalorder %s25, 0
      %p200 = por %p198, %p199
      %p201 = scmp.ne.s32.totalorder %s187, %s188
      %p202 = scmp.eq.s32.totalorder %s26, 7
      %p203 = por %p201, %p202
      %p205 = scmp.ne.s32.totalorder %s188, %s204
      %p206 = scmp.eq.s32.totalorder %s26, 0
      %p207 = por %p205, %p206
      %s209 = sadd.s32 %s208, 1
      %p212 = scmp.eq.s32.totalorder %s20, 7
      %p213 = scmp.ne.s32.totalorder %s208, %s210
      %p214 = scmp.eq.s32.totalorder %s20, 0
      %p215 = por %p213, %p214
      %p216 = scmp.ne.s32.totalorder %s208, %s210
      %p217 = scmp.eq.s32.totalorder %s25, 7
      %p218 = por %p216, %p217
      %p219 = scmp.ne.s32.totalorder %s210, %s211
      %p220 = scmp.eq.s32.totalorder %s25, 0
      %p221 = por %p219, %p220
      %p222 = scmp.ne.s32.totalorder %s210, %s211
      %p223 = scmp.eq.s32.totalorder %s26, 7
      %p224 = por %p222, %p223
      %p226 = scmp.ne.s32.totalorder %s211, %s225
      %p227 = scmp.eq.s32.totalorder %s26, 0
      %p228 = por %p226, %p227
      %p229 = scmp.le.s32.totalorder 1, %s20
      %p230 = scmp.lt.s32.totalorder %s20, 9
      %p231 = pnand %p229, %p230
      %p232 = pneg %p231
      // Predicated region
      $region9: #{tpu_custom_call.1} parent=5 // pred_check
        _
      $region10: #{tpu_custom_call.1} parent=5 // pred_check_branch
        %234 = sbr.rel (%p231) target = $region12
      $region11: #{tpu_custom_call.1} parent=5 // pred_region
        %s235 = ssub.s32 %s20, 1
        // Predicated region
        $region13: #{tpu_custom_call.1} parent=11 // pred_check
          %p236 = pneg %p60
        $region14: #{tpu_custom_call.1} parent=11 // pred_check_branch
          %238 = sbr.rel (%p236) target = $region16
        $region15: #{tpu_custom_call.1} parent=11 // pred_region
          %s240 = ssub.s32 32, 32
          %241 = vsyncadd [#allocation6], %s240
          %s243 = sshll.u32 [#allocation5], 4
          %s244 = int_to_ptr.vmem [resolvable:$true] %s243
          %246 = dma.hbm_to_vmem [thread:$0]  %s0, 32, %s244, [#allocation6]
        $region16: #{tpu_custom_call.1} parent=11 // pred_fallthru
          _
      $region12: #{tpu_custom_call.1} parent=5 // pred_fallthru
        _
      %p247 = scmp.lt.s32.totalorder %s20, 8
      // Predicated region
      $region17: #{tpu_custom_call.1} parent=5 // pred_check
        %p248 = pneg %p247
      $region18: #{tpu_custom_call.1} parent=5 // pred_check_branch
        %250 = sbr.rel (%p248) target = $region20
      $region19: #{tpu_custom_call.1} parent=5 // pred_region
        // Predicated region
        $region21: #{tpu_custom_call.1} parent=19 // pred_check
          %p251 = pneg %p80
        $region22: #{tpu_custom_call.1} parent=19 // pred_check_branch
          %253 = sbr.rel (%p251) target = $region24
        $region23: #{tpu_custom_call.1} parent=19 // pred_region
          %s254 = sand.u32 %s20, 1
          %s255 = scalar_lea.sflag [#allocation9], %s254
          %s256 = sand.u32 %s70, 1
          %s257 = smul.addr %s256, 8
          %s258 = scalar_lea.vmem [#allocation8], %s257
          %s260 = ssub.s32 128, 128
          %261 = vsyncadd %s255, %s260
          %s262 = smul.addr %s27, 4
          %s263 = smul.addr %s262, 32
          %s264 = scalar_lea.hbm %s1, %s263
          %s266 = sshll.u32 %s258, 4
          %s267 = int_to_ptr.vmem [resolvable:$true] %s266
          %269 = dma.hbm_to_vmem [thread:$0]  %s264, 128, %s267, %s255
        $region24: #{tpu_custom_call.1} parent=19 // pred_fallthru
          _
        // Predicated region
        $region25: #{tpu_custom_call.1} parent=19 // pred_check
          %p270 = pneg %p112
        $region26: #{tpu_custom_call.1} parent=19 // pred_check_branch
          %272 = sbr.rel (%p270) target = $region28
        $region27: #{tpu_custom_call.1} parent=19 // pred_region
          %s273 = sand.u32 %s20, 1
          %s274 = scalar_lea.sflag [#allocation9], %s273
          %s275 = sand.u32 %s102, 1
          %s276 = smul.addr %s275, 256
          %s277 = scalar_lea.vmem [#allocation10], %s276
          %s278 = ssub.s32 1, %s28
          %s279 = smul.u32 %s29, %s278
          %s280 = smul.u32 4, %s279
          %s282 = ssub.s32 4096, 4096
          %283 = vsyncadd %s274, %s282
          %s284 = smul.addr %s27, 64
          %s285 = sadd.s32 %s280, %s284
          %s286 = smul.addr %s285, 64
          %s287 = scalar_lea.hbm %s2, %s286
          %s288 = sshll.u32 %s277, 4
          %s289 = int_to_ptr.vmem [resolvable:$true] %s288
          %294 = dma.hbm_to_vmem [thread:$0]  %s287, 4096, %s289, %s274, 256, 256, 16
        $region28: #{tpu_custom_call.1} parent=19 // pred_fallthru
          _
        // Predicated region
        $region29: #{tpu_custom_call.1} parent=19 // pred_check
          %p295 = pneg %p138
        $region30: #{tpu_custom_call.1} parent=19 // pred_check_branch
          %297 = sbr.rel (%p295) target = $region32
        $region31: #{tpu_custom_call.1} parent=19 // pred_region
          %s298 = sand.u32 %s20, 1
          %s299 = scalar_lea.sflag [#allocation12], %s298
          %s300 = sand.u32 %s128, 1
          %s301 = smul.addr %s300, 8
          %s302 = scalar_lea.vmem [#allocation11], %s301
          %s304 = ssub.s32 128, 128
          %305 = vsyncadd %s299, %s304
          %s306 = smul.addr %s27, 4
          %s307 = smul.addr %s306, 32
          %s308 = scalar_lea.hbm %s3, %s307
          %s310 = sshll.u32 %s302, 4
          %s311 = int_to_ptr.vmem [resolvable:$true] %s310
          %313 = dma.hbm_to_vmem [thread:$0]  %s308, 128, %s311, %s299
        $region32: #{tpu_custom_call.1} parent=19 // pred_fallthru
          _
        // Predicated region
        $region33: #{tpu_custom_call.1} parent=19 // pred_check
          %p314 = pneg %p168
        $region34: #{tpu_custom_call.1} parent=19 // pred_check_branch
          %316 = sbr.rel (%p314) target = $region36
        $region35: #{tpu_custom_call.1} parent=19 // pred_region
          %s317 = sand.u32 %s20, 1
          %s318 = scalar_lea.sflag [#allocation12], %s317
          %s319 = sand.u32 %s158, 1
          %s320 = smul.addr %s319, 256
          %s321 = scalar_lea.vmem [#allocation13], %s320
          %s322 = smul.u32 %s29, %s28
          %s323 = smul.u32 64, %s322
          %s325 = ssub.s32 4096, 4096
          %326 = vsyncadd %s318, %s325
          %s327 = smul.addr %s27, 64
          %s328 = sadd.s32 %s323, %s327
          %s329 = smul.addr %s328, 64
          %s330 = scalar_lea.hbm %s4, %s329
          %s331 = sshll.u32 %s321, 4
          %s332 = int_to_ptr.vmem [resolvable:$true] %s331
          %337 = dma.hbm_to_vmem [thread:$0]  %s330, 4096, %s332, %s318, 64, 64, 4
        $region36: #{tpu_custom_call.1} parent=19 // pred_fallthru
          _
        // Predicated region
        $region37: #{tpu_custom_call.1} parent=19 // pred_check
          %p338 = pneg %p194
        $region38: #{tpu_custom_call.1} parent=19 // pred_check_branch
          %340 = sbr.rel (%p338) target = $region40
        $region39: #{tpu_custom_call.1} parent=19 // pred_region
          %p341 = scmp.lt.s32.totalorder %s27, 3
          %s342 = scalar_select %p341, %s27, 3
          %s343 = smul.addr %s342, 2
          %s344 = scalar_lea.vmem %s5, %s343
        $region40: #{tpu_custom_call.1} parent=19 // pred_fallthru
          _
      $region20: #{tpu_custom_call.1} parent=5 // pred_fallthru
        _
      %p345 = scmp.le.s32.totalorder 1, %s20
      %p346 = scmp.lt.s32.totalorder %s20, 9
      %p347 = pnand %p345, %p346
      %p348 = pneg %p347
      // Predicated region
      $region41: #{tpu_custom_call.1} parent=5 // pred_check
        _
      $region42: #{tpu_custom_call.1} parent=5 // pred_check_branch
        %350 = sbr.rel (%p347) target = $region44
      $region43: #{tpu_custom_call.1} parent=5 // pred_region
        %s351 = ssub.s32 %s20, 1
        // Predicated region
        $region45: #{tpu_custom_call.1} parent=43 // pred_check
          %p352 = pneg %p60
        $region46: #{tpu_custom_call.1} parent=43 // pred_check_branch
          %354 = sbr.rel (%p352) target = $region48
        $region47: #{tpu_custom_call.1} parent=43 // pred_region
          %355 = dma.done [#allocation6], 32
        $region48: #{tpu_custom_call.1} parent=43 // pred_fallthru
          _
        %s356 = sand.u32 %s25, 1
        %s357 = scalar_lea.sflag [#allocation9], %s356
        %s358 = sand.u32 %s73, 1
        %s359 = smul.addr %s358, 8
        %s360 = scalar_lea.vmem [#allocation8], %s359
        // Predicated region
        $region49: #{tpu_custom_call.1} parent=43 // pred_check
          %p361 = pneg %p86
        $region50: #{tpu_custom_call.1} parent=43 // pred_check_branch
          %363 = sbr.rel (%p361) target = $region52
        $region51: #{tpu_custom_call.1} parent=43 // pred_region
          %364 = dma.done %s357, 128
        $region52: #{tpu_custom_call.1} parent=43 // pred_fallthru
          _
        %s365 = sand.u32 %s25, 1
        %s366 = scalar_lea.sflag [#allocation9], %s365
        %s367 = sand.u32 %s105, 1
        %s368 = smul.addr %s367, 256
        %s369 = scalar_lea.vmem [#allocation10], %s368
        // Predicated region
        $region53: #{tpu_custom_call.1} parent=43 // pred_check
          %p370 = pneg %p118
        $region54: #{tpu_custom_call.1} parent=43 // pred_check_branch
          %372 = sbr.rel (%p370) target = $region56
        $region55: #{tpu_custom_call.1} parent=43 // pred_region
          %373 = dma.done %s366, 4096
        $region56: #{tpu_custom_call.1} parent=43 // pred_fallthru
          _
        %s374 = sand.u32 %s25, 1
        %s375 = scalar_lea.sflag [#allocation12], %s374
        %s376 = sand.u32 %s131, 1
        %s377 = smul.addr %s376, 8
        %s378 = scalar_lea.vmem [#allocation11], %s377
        // Predicated region
        $region57: #{tpu_custom_call.1} parent=43 // pred_check
          %p379 = pneg %p144
        $region58: #{tpu_custom_call.1} parent=43 // pred_check_branch
          %381 = sbr.rel (%p379) target = $region60
        $region59: #{tpu_custom_call.1} parent=43 // pred_region
          %382 = dma.done %s375, 128
        $region60: #{tpu_custom_call.1} parent=43 // pred_fallthru
          _
        %s383 = sand.u32 %s25, 1
        %s384 = scalar_lea.sflag [#allocation12], %s383
        %s385 = sand.u32 %s161, 1
        %s386 = smul.addr %s385, 256
        %s387 = scalar_lea.vmem [#allocation13], %s386
        // Predicated region
        $region61: #{tpu_custom_call.1} parent=43 // pred_check
          %p388 = pneg %p174
        $region62: #{tpu_custom_call.1} parent=43 // pred_check_branch
          %390 = sbr.rel (%p388) target = $region64
        $region63: #{tpu_custom_call.1} parent=43 // pred_region
          %391 = dma.done %s384, 4096
        $region64: #{tpu_custom_call.1} parent=43 // pred_fallthru
          _
        %p392 = pneg %p60
        %p393 = pneg %p57
        %s394 = sand.u32 %s25, 1
        %s395 = scalar_lea.sflag [#allocation9], %s394
        %s396 = sand.u32 %s73, 1
        %s397 = smul.addr %s396, 8
        %s398 = scalar_lea.vmem [#allocation8], %s397
        %p399 = pneg %p86
        %p400 = pneg %p83
        %s401 = sand.u32 %s25, 1
        %s402 = scalar_lea.sflag [#allocation9], %s401
        %s403 = sand.u32 %s105, 1
        %s404 = smul.addr %s403, 256
        %s405 = scalar_lea.vmem [#allocation10], %s404
        %p406 = pneg %p118
        %p407 = pneg %p115
        %s408 = sand.u32 %s25, 1
        %s409 = scalar_lea.sflag [#allocation12], %s408
        %s410 = sand.u32 %s131, 1
        %s411 = smul.addr %s410, 8
        %s412 = scalar_lea.vmem [#allocation11], %s411
        %p413 = pneg %p144
        %p414 = pneg %p141
        %s415 = sand.u32 %s25, 1
        %s416 = scalar_lea.sflag [#allocation12], %s415
        %s417 = sand.u32 %s161, 1
        %s418 = smul.addr %s417, 256
        %s419 = scalar_lea.vmem [#allocation13], %s418
        %p420 = pneg %p174
        %p421 = pneg %p171
        %p422 = scmp.lt.s32.totalorder %s30, 3
        %s423 = scalar_select %p422, %s30, 3
        %s424 = smul.addr %s423, 2
        %s425 = scalar_lea.vmem %s5, %s424
        %p426 = pneg %p200
        %p427 = pneg %p197
        %p428 = pneg %p221
        %p429 = pneg %p218
        %s430 = ssub.s32 1, %s31
        %s431 = smul.u32 %s32, %s430
        %s432 = smul.u32 4, %s431
        %s433 = smul.u32 %s32, %s31
        %s434 = smul.u32 64, %s433
        %p435 = scmp.lt.s32.totalorder %s30, 3
        %s436 = scalar_select %p435, %s30, 3
        %s437 = smul.addr %s436, 2
        %s438 = scalar_lea.vmem %s5, %s437
        %s440 = smul.u32 %s32, 512
        %p441 = scmp.eq.s32.totalorder %s30, 0
        %p442 = scmp.eq.s32.totalorder %s31, 0
        %p443 = pnand %p441, %p442
        %p444 = pneg %p443
        %p445 = scmp.eq.s32.totalorder %s32, 0
        %p446 = pnand %p444, %p445
        %p447 = pneg %p446
        // Predicated region
        $region65: #{tpu_custom_call.1} parent=43 // pred_check
          _
        $region66: #{tpu_custom_call.1} parent=43 // pred_check_branch
          %449 = sbr.rel (%p446) target = $region68
        $region67: #{tpu_custom_call.1} parent=43 // pred_region
          %v450 = vld [vmem:[#allocation5] sm:$0x3]
          %451 = vst [vmem:[#allocation14] sm:$0x3] %v450
        $region68: #{tpu_custom_call.1} parent=43 // pred_fallthru
          _
        %p452 = pnand %p442, %p445
        %p453 = pneg %p452
        // Predicated region
        $region69: #{tpu_custom_call.1} parent=43 // pred_check
          _
        $region70: #{tpu_custom_call.1} parent=43 // pred_check_branch
          %455 = sbr.rel (%p452) target = $region72
        $region71: #{tpu_custom_call.1} parent=43 // pred_region
          %v456 = vld [vmem:[#allocation14] sm:$0x3]
          %v457 = vpack.c.bf16 %v456, %v456
          %458 = vst [vmem:[#allocation4] sm:$0x1] %v457
        $region72: #{tpu_custom_call.1} parent=43 // pred_fallthru
          _
        // Predicated region
        $region73: #{tpu_custom_call.1} parent=43 // pred_check
          %p459 = pneg %p442
        $region74: #{tpu_custom_call.1} parent=43 // pred_check_branch
          %461 = sbr.rel (%p459) target = $region76
        $region75: #{tpu_custom_call.1} parent=43 // pred_region
          %v462 = vld [vmem:[#allocation4] sm:$0x1]
          %v463 = vld [vmem:[%s369] sm:$0xff]
          %v464 = vld [vmem:[%s369 + $0x8] sm:$0xff]
          %v465 = vld [vmem:[%s369 + $0x10] sm:$0xff]
          %v466 = vld [vmem:[%s369 + $0x18] sm:$0xff]
          %v467 = vld [vmem:[%s369 + $0x20] sm:$0xff]
          %v468 = vld [vmem:[%s369 + $0x28] sm:$0xff]
          %v469 = vld [vmem:[%s369 + $0x30] sm:$0xff]
          %v470 = vld [vmem:[%s369 + $0x38] sm:$0xff]
          %v471 = vld [vmem:[%s369 + $0x40] sm:$0xff]
          %v472 = vld [vmem:[%s369 + $0x48] sm:$0xff]
          %v473 = vld [vmem:[%s369 + $0x50] sm:$0xff]
          %v474 = vld [vmem:[%s369 + $0x58] sm:$0xff]
          %v475 = vld [vmem:[%s369 + $0x60] sm:$0xff]
          %v476 = vld [vmem:[%s369 + $0x68] sm:$0xff]
          %v477 = vld [vmem:[%s369 + $0x70] sm:$0xff]
          %v478 = vld [vmem:[%s369 + $0x78] sm:$0xff]
          %v479 = vld [vmem:[%s369 + $0x80] sm:$0xff]
          %v480 = vld [vmem:[%s369 + $0x88] sm:$0xff]
          %v481 = vld [vmem:[%s369 + $0x90] sm:$0xff]
          %v482 = vld [vmem:[%s369 + $0x98] sm:$0xff]
          %v483 = vld [vmem:[%s369 + $0xa0] sm:$0xff]
          %v484 = vld [vmem:[%s369 + $0xa8] sm:$0xff]
          %v485 = vld [vmem:[%s369 + $0xb0] sm:$0xff]
          %v486 = vld [vmem:[%s369 + $0xb8] sm:$0xff]
          %v487 = vld [vmem:[%s369 + $0xc0] sm:$0xff]
          %v488 = vld [vmem:[%s369 + $0xc8] sm:$0xff]
          %v489 = vld [vmem:[%s369 + $0xd0] sm:$0xff]
          %v490 = vld [vmem:[%s369 + $0xd8] sm:$0xff]
          %v491 = vld [vmem:[%s369 + $0xe0] sm:$0xff]
          %v492 = vld [vmem:[%s369 + $0xe8] sm:$0xff]
          %v493 = vld [vmem:[%s369 + $0xf0] sm:$0xff]
          %v494 = vld [vmem:[%s369 + $0xf8] sm:$0xff]
          %s495 = sshra.s32 %s440, 7
          %s496 = sand.u32 %s440, 127
          %s497 = smul.addr %s495, 2
          %s498 = scalar_lea.vmem %s360, %s497 [#allocation8]
          %v499 = vld [vmem:[%s498] sm:$0xff]
          %v532 = vunpack.c.l.b16 %v463
          %v533 = vunpack.c.h.b16 %v463
          %v534 = vunpack.c.l.b16 %v464
          %v535 = vunpack.c.h.b16 %v464
          %v536 = vunpack.c.l.b16 %v465
          %v537 = vunpack.c.h.b16 %v465
          %v538 = vunpack.c.l.b16 %v466
          %v539 = vunpack.c.h.b16 %v466
          %v540 = vunpack.c.l.b16 %v467
          %v541 = vunpack.c.h.b16 %v467
          %v542 = vunpack.c.l.b16 %v468
          %v543 = vunpack.c.h.b16 %v468
          %v544 = vunpack.c.l.b16 %v469
          %v545 = vunpack.c.h.b16 %v469
          %v546 = vunpack.c.l.b16 %v470
          %v547 = vunpack.c.h.b16 %v470
          %v548 = vunpack.c.l.b16 %v471
          %v549 = vunpack.c.h.b16 %v471
          %v550 = vunpack.c.l.b16 %v472
          %v551 = vunpack.c.h.b16 %v472
          %v552 = vunpack.c.l.b16 %v473
          %v553 = vunpack.c.h.b16 %v473
          %v554 = vunpack.c.l.b16 %v474
          %v555 = vunpack.c.h.b16 %v474
          %v556 = vunpack.c.l.b16 %v475
          %v557 = vunpack.c.h.b16 %v475
          %v558 = vunpack.c.l.b16 %v476
          %v559 = vunpack.c.h.b16 %v476
          %v560 = vunpack.c.l.b16 %v477
          %v561 = vunpack.c.h.b16 %v477
          %v562 = vunpack.c.l.b16 %v478
          %v563 = vunpack.c.h.b16 %v478
          %v564 = vunpack.c.l.b16 %v479
          %v565 = vunpack.c.h.b16 %v479
          %v566 = vunpack.c.l.b16 %v480
          %v567 = vunpack.c.h.b16 %v480
          %v568 = vunpack.c.l.b16 %v481
          %v569 = vunpack.c.h.b16 %v481
          %v570 = vunpack.c.l.b16 %v482
          %v571 = vunpack.c.h.b16 %v482
          %v572 = vunpack.c.l.b16 %v483
          %v573 = vunpack.c.h.b16 %v483
          %v574 = vunpack.c.l.b16 %v484
          %v575 = vunpack.c.h.b16 %v484
          %v576 = vunpack.c.l.b16 %v485
          %v577 = vunpack.c.h.b16 %v485
          %v578 = vunpack.c.l.b16 %v486
          %v579 = vunpack.c.h.b16 %v486
          %v580 = vunpack.c.l.b16 %v487
          %v581 = vunpack.c.h.b16 %v487
          %v582 = vunpack.c.l.b16 %v488
          %v583 = vunpack.c.h.b16 %v488
          %v584 = vunpack.c.l.b16 %v489
          %v585 = vunpack.c.h.b16 %v489
          %v586 = vunpack.c.l.b16 %v490
          %v587 = vunpack.c.h.b16 %v490
          %v588 = vunpack.c.l.b16 %v491
          %v589 = vunpack.c.h.b16 %v491
          %v590 = vunpack.c.l.b16 %v492
          %v591 = vunpack.c.h.b16 %v492
          %v592 = vunpack.c.l.b16 %v493
          %v593 = vunpack.c.h.b16 %v493
          %v594 = vunpack.c.l.b16 %v494
          %v595 = vunpack.c.h.b16 %v494
          %v596 = vpack.c.b16 %v536, %v532
          %v597 = vpack.c.b16 %v537, %v533
          %v598 = vpack.c.b16 %v538, %v534
          %v599 = vpack.c.b16 %v539, %v535
          %v600 = vpack.c.b16 %v544, %v540
          %v601 = vpack.c.b16 %v545, %v541
          %v602 = vpack.c.b16 %v546, %v542
          %v603 = vpack.c.b16 %v547, %v543
          %v604 = vpack.c.b16 %v552, %v548
          %v605 = vpack.c.b16 %v553, %v549
          %v606 = vpack.c.b16 %v554, %v550
          %v607 = vpack.c.b16 %v555, %v551
          %v608 = vpack.c.b16 %v560, %v556
          %v609 = vpack.c.b16 %v561, %v557
          %v610 = vpack.c.b16 %v562, %v558
          %v611 = vpack.c.b16 %v563, %v559
          %v612 = vpack.c.b16 %v568, %v564
          %v613 = vpack.c.b16 %v569, %v565
          %v614 = vpack.c.b16 %v570, %v566
          %v615 = vpack.c.b16 %v571, %v567
          %v616 = vpack.c.b16 %v576, %v572
          %v617 = vpack.c.b16 %v577, %v573
          %v618 = vpack.c.b16 %v578, %v574
          %v619 = vpack.c.b16 %v579, %v575
          %v620 = vpack.c.b16 %v584, %v580
          %v621 = vpack.c.b16 %v585, %v581
          %v622 = vpack.c.b16 %v586, %v582
          %v623 = vpack.c.b16 %v587, %v583
          %v624 = vpack.c.b16 %v592, %v588
          %v625 = vpack.c.b16 %v593, %v589
          %v626 = vpack.c.b16 %v594, %v590
          %v627 = vpack.c.b16 %v595, %v591
          %v661 = vcombine.high %v499, %v499
          %v663 = vunpack.c.l.s4 1983009808
          %v664 = vunpack.c.0.s8 %v663
          %v665 = vlaneseq
          %v666 = vshrl.u32 %v665, 7
          %v667 = vsub.s32 %v664, %v666
          %v668 = vrot.slane %v499, %v667
          %v670 = vunpack.c.l.s4 1983009808
          %v671 = vunpack.c.0.s8 %v670
          %v672 = vlaneseq
          %v673 = vshrl.u32 %v672, 7
          %v674 = vsub.s32 %v671, %v673
          %v675 = vrot.slane %v661, %v674
          %v676 = vcombine.high %v668, %v668
          %v677 = vcombine.high %v675, %v675
          %682 = vmatprep.subr.bf16.mxu0 %v625
          %683 = vmatpush1.bf16.msra.mxu0 %v624
          %684 = vmatprep.subr.bf16.mxu0 %v621
          %685 = vmatpush1.bf16.msra.mxu0 %v620
          %686 = vmatprep.subr.bf16.mxu0 %v617
          %687 = vmatpush1.bf16.msra.mxu0 %v616
          %688 = vmatprep.subr.bf16.mxu0 %v613
          %689 = vmatpush1.bf16.msra.mxu0 %v612
          %690 = vmatprep.subr.bf16.mxu0 %v609
          %691 = vmatpush1.bf16.msra.mxu0 %v608
          %692 = vmatprep.subr.bf16.mxu0 %v605
          %693 = vmatpush1.bf16.msra.mxu0 %v604
          %694 = vmatprep.subr.bf16.mxu0 %v601
          %695 = vmatpush1.bf16.msra.mxu0 %v600
          %696 = vmatprep.subr.bf16.mxu0 %v597
          %697 = vmatpush1.bf16.msra.mxu0 %v596
          %698 = vmatprep.subr.bf16.mxu0 0
          %699 = vmatpush2.bf16.msra.mxu0 0
          %700 = vmatprep.subr.bf16.mxu0 0
          %701 = vmatpush2.bf16.msra.mxu0 0
          %702 = vmatprep.subr.bf16.mxu0 0
          %703 = vmatpush2.bf16.msra.mxu0 0
          %704 = vmatprep.subr.bf16.mxu0 0
          %705 = vmatpush2.bf16.msra.mxu0 0
          %706 = vmatprep.subr.bf16.mxu0 0
          %707 = vmatpush2.bf16.msra.mxu0 0
          %708 = vmatprep.subr.bf16.mxu0 0
          %709 = vmatpush2.bf16.msra.mxu0 0
          %710 = vmatprep.subr.bf16.mxu0 0
          %711 = vmatpush2.bf16.msra.mxu0 0
          %712 = vmatprep.subr.bf16.mxu0 0
          %713 = vmatpush2.bf16.msra.mxu0 0
          %714 = vmatprep.mubr.bf16.mxu0 0
          %715 = vmatmul.mubr.bf16.gmra.mxu0 %v462
          %v716 = vpop.f32.mrf.mxu0
          %v717 = vadd.f32 %v668, %v716
          %v718 = vpop.f32.mrf.mxu0
          %v719 = vadd.f32 %v676, %v718
          %v720 = vpop.f32.mrf.mxu0
          %v721 = vpop.f32.mrf.mxu0
          %722 = vdwg.mxu0
          %723 = vmatprep.subr.bf16.mxu0 %v627
          %724 = vmatpush1.bf16.msra.mxu0 %v626
          %725 = vmatprep.subr.bf16.mxu0 %v623
          %726 = vmatpush1.bf16.msra.mxu0 %v622
          %727 = vmatprep.subr.bf16.mxu0 %v619
          %728 = vmatpush1.bf16.msra.mxu0 %v618
          %729 = vmatprep.subr.bf16.mxu0 %v615
          %730 = vmatpush1.bf16.msra.mxu0 %v614
          %731 = vmatprep.subr.bf16.mxu0 %v611
          %732 = vmatpush1.bf16.msra.mxu0 %v610
          %733 = vmatprep.subr.bf16.mxu0 %v607
          %734 = vmatpush1.bf16.msra.mxu0 %v606
          %735 = vmatprep.subr.bf16.mxu0 %v603
          %736 = vmatpush1.bf16.msra.mxu0 %v602
          %737 = vmatprep.subr.bf16.mxu0 %v599
          %738 = vmatpush1.bf16.msra.mxu0 %v598
          %739 = vmatprep.subr.bf16.mxu0 0
          %740 = vmatpush2.bf16.msra.mxu0 0
          %741 = vmatprep.subr.bf16.mxu0 0
          %742 = vmatpush2.bf16.msra.mxu0 0
          %743 = vmatprep.subr.bf16.mxu0 0
          %744 = vmatpush2.bf16.msra.mxu0 0
          %745 = vmatprep.subr.bf16.mxu0 0
          %746 = vmatpush2.bf16.msra.mxu0 0
          %747 = vmatprep.subr.bf16.mxu0 0
          %748 = vmatpush2.bf16.msra.mxu0 0
          %749 = vmatprep.subr.bf16.mxu0 0
          %750 = vmatpush2.bf16.msra.mxu0 0
          %751 = vmatprep.subr.bf16.mxu0 0
          %752 = vmatpush2.bf16.msra.mxu0 0
          %753 = vmatprep.subr.bf16.mxu0 0
          %754 = vmatpush2.bf16.msra.mxu0 0
          %755 = vmatprep.mubr.bf16.mxu0 0
          %756 = vmatmul.mubr.bf16.gmra.mxu0 %v462
          %v757 = vpop.f32.mrf.mxu0
          %v758 = vadd.f32 %v675, %v757
          %v759 = vpop.f32.mrf.mxu0
          %v760 = vadd.f32 %v677, %v759
          %v761 = vpop.f32.mrf.mxu0
          %v762 = vpop.f32.mrf.mxu0
          %763 = vdwg.mxu0
          %v768 = vcombine.low %v717, %v719
          %v769 = vcombine.low %v758, %v760
          %v771 = vunpack.c.l.s4 1983009808
          %v772 = vunpack.c.0.s8 %v771
          %v773 = vlaneseq
          %v774 = vshrl.u32 %v773, 7
          %v775 = vsub.s32 %v772, %v774
          %v776 = vrot.slane %v768, %v775
          %v778 = vunpack.c.l.s4 1983009808
          %v779 = vunpack.c.0.s8 %v778
          %v780 = vlaneseq
          %v781 = vshrl.u32 %v780, 7
          %v782 = vsub.s32 %v779, %v781
          %v783 = vrot.slane %v769, %v782
          %v784 = vcombine.low %v776, %v783
          %s786 = smul.addr %s495, 2
          %s787 = scalar_lea.vmem [#allocation2], %s786
          %788 = vst [vmem:[%s787] sm:$0xff] %v784
        $region76: #{tpu_custom_call.1} parent=43 // pred_fallthru
          _
        // Predicated region
        $region77: #{tpu_custom_call.1} parent=43 // pred_check
          _
        $region78: #{tpu_custom_call.1} parent=43 // pred_check_branch
          %790 = sbr.rel (%p452) target = $region80
        $region79: #{tpu_custom_call.1} parent=43 // pred_region
          %v791 = vld [vmem:[#allocation2] sm:$0xff]
          %v792 = vld [vmem:[%s378] ss:$2 sm:$0xf]
          %s793 = scalar_lea.vmem %s378, 1 [#allocation11]
          %v794 = vld [vmem:[%s793] ss:$2 sm:$0xf]
          %v796 = vcombine.high %v791, %v791
          %v798 = vunpack.c.l.s4 1983009808
          %v799 = vunpack.c.0.s8 %v798
          %v800 = vlaneseq
          %v801 = vshrl.u32 %v800, 7
          %v802 = vsub.s32 %v799, %v801
          %v803 = vrot.slane %v791, %v802
          %v805 = vunpack.c.l.s4 1983009808
          %v806 = vunpack.c.0.s8 %v805
          %v807 = vlaneseq
          %v808 = vshrl.u32 %v807, 7
          %v809 = vsub.s32 %v806, %v808
          %v810 = vrot.slane %v796, %v809
          %v811 = vcombine.high %v803, %v803
          %v812 = vcombine.high %v810, %v810
          %vm817 = vcmask 1041408
          %v818 = vsel %vm817, %v803, 0.0
          %v819 = vsel %vm817, %v811, 0.0
          %v820 = vadd.f32 %v818, %v819
          %v821 = vsel %vm817, %v810, 0.0
          %v822 = vadd.f32 %v820, %v821
          %v823 = vsel %vm817, %v812, 0.0
          %v824 = vadd.f32 %v822, %v823
          %825 = vadd.xlane.f32.xlu0 %v824
          %v826 = vpop.xlane.xlu0 %825
          %v827 = vrcp.pop 512.0
          %v828 = vmul.f32 %v826, %v827
          %v831 = vunpack.c.l.s4 269488144
          %v832 = vunpack.c.0.s8 %v831
          %v833 = vlaneseq
          %v834 = vshrl.u32 %v833, 7
          %v835 = vsub.s32 %v832, %v834
          %v836 = vrot.slane %v828, %v835
          %v838 = vsub.f32 %v791, %v836
          %v839 = vmul.f32 %v838, %v838
          %v841 = vcombine.high %v839, %v839
          %v843 = vunpack.c.l.s4 1983009808
          %v844 = vunpack.c.0.s8 %v843
          %v845 = vlaneseq
          %v846 = vshrl.u32 %v845, 7
          %v847 = vsub.s32 %v844, %v846
          %v848 = vrot.slane %v839, %v847
          %v850 = vunpack.c.l.s4 1983009808
          %v851 = vunpack.c.0.s8 %v850
          %v852 = vlaneseq
          %v853 = vshrl.u32 %v852, 7
          %v854 = vsub.s32 %v851, %v853
          %v855 = vrot.slane %v841, %v854
          %v856 = vcombine.high %v848, %v848
          %v857 = vcombine.high %v855, %v855
          %v862 = vsel %vm817, %v848, 0.0
          %v863 = vsel %vm817, %v856, 0.0
          %v864 = vadd.f32 %v862, %v863
          %v865 = vsel %vm817, %v855, 0.0
          %v866 = vadd.f32 %v864, %v865
          %v867 = vsel %vm817, %v857, 0.0
          %v868 = vadd.f32 %v866, %v867
          %869 = vadd.xlane.f32.xlu0 %v868
          %v870 = vpop.xlane.xlu0 %869
          %v871 = vmul.f32 %v870, %v827
          %v872 = vadd.f32 %v871, 1e-05
          %v873 = vrsqrt.pop %v872
          %v876 = vunpack.c.l.s4 269488144
          %v877 = vunpack.c.0.s8 %v876
          %v878 = vlaneseq
          %v879 = vshrl.u32 %v878, 7
          %v880 = vsub.s32 %v877, %v879
          %v881 = vrot.slane %v873, %v880
          %v883 = vmul.f32 %v838, %v881
          %v885 = vlaneseq
          %v886 = vshrl.u32 %v885, 7
          %v887 = vsub.s32 0, %v886
          %v888 = vrot.slane %v792, %v887
          %v889 = vlaneseq
          %v890 = vshrl.u32 %v889, 7
          %v891 = vsub.s32 1, %v890
          %v892 = vrot.slane %v792, %v891
          %v893 = vlaneseq
          %v894 = vshrl.u32 %v893, 7
          %v895 = vsub.s32 2, %v894
          %v896 = vrot.slane %v792, %v895
          %v897 = vlaneseq
          %v898 = vshrl.u32 %v897, 7
          %v899 = vsub.s32 3, %v898
          %v900 = vrot.slane %v792, %v899
          %v901 = vcombine.low %v888, %v892
          %v902 = vcombine.low %v896, %v900
          %v904 = vunpack.c.l.s4 1983009808
          %v905 = vunpack.c.0.s8 %v904
          %v906 = vlaneseq
          %v907 = vshrl.u32 %v906, 7
          %v908 = vsub.s32 %v905, %v907
          %v909 = vrot.slane %v901, %v908
          %v911 = vunpack.c.l.s4 1983009808
          %v912 = vunpack.c.0.s8 %v911
          %v913 = vlaneseq
          %v914 = vshrl.u32 %v913, 7
          %v915 = vsub.s32 %v912, %v914
          %v916 = vrot.slane %v902, %v915
          %v917 = vcombine.low %v909, %v916
          %v919 = vmul.f32 %v883, %v917
          %v921 = vlaneseq
          %v922 = vshrl.u32 %v921, 7
          %v923 = vsub.s32 0, %v922
          %v924 = vrot.slane %v794, %v923
          %v925 = vlaneseq
          %v926 = vshrl.u32 %v925, 7
          %v927 = vsub.s32 1, %v926
          %v928 = vrot.slane %v794, %v927
          %v929 = vlaneseq
          %v930 = vshrl.u32 %v929, 7
          %v931 = vsub.s32 2, %v930
          %v932 = vrot.slane %v794, %v931
          %v933 = vlaneseq
          %v934 = vshrl.u32 %v933, 7
          %v935 = vsub.s32 3, %v934
          %v936 = vrot.slane %v794, %v935
          %v937 = vcombine.low %v924, %v928
          %v938 = vcombine.low %v932, %v936
          %v940 = vunpack.c.l.s4 1983009808
          %v941 = vunpack.c.0.s8 %v940
          %v942 = vlaneseq
          %v943 = vshrl.u32 %v942, 7
          %v944 = vsub.s32 %v941, %v943
          %v945 = vrot.slane %v937, %v944
          %v947 = vunpack.c.l.s4 1983009808
          %v948 = vunpack.c.0.s8 %v947
          %v949 = vlaneseq
          %v950 = vshrl.u32 %v949, 7
          %v951 = vsub.s32 %v948, %v950
          %v952 = vrot.slane %v938, %v951
          %v953 = vcombine.low %v945, %v952
          %v955 = vadd.f32 %v919, %v953
          %v956 = vmul.f32 %v955, 0.5
          %v957 = vmul.f32 %v955, 0.70710677
          %v958 = verf.f32.pop %v957
          %v959 = vadd.f32 %v958, 1.0
          %v960 = vmul.f32 %v956, %v959
          %961 = vst [vmem:[#allocation2] sm:$0xff] %v960
          %962 = vst [vmem:[#allocation3] sm:$0x3] 0.0
        $region80: #{tpu_custom_call.1} parent=43 // pred_fallthru
          _
        %p963 = scmp.eq.s32.totalorder %s31, 1
        // Predicated region
        $region81: #{tpu_custom_call.1} parent=43 // pred_check
          %p964 = pneg %p963
        $region82: #{tpu_custom_call.1} parent=43 // pred_check_branch
          %966 = sbr.rel (%p964) target = $region84
        $region83: #{tpu_custom_call.1} parent=43 // pred_region
          %s967 = sshra.s32 %s440, 7
          %s968 = sand.u32 %s440, 127
          %s969 = smul.addr %s967, 2
          %s970 = scalar_lea.vmem [#allocation2], %s969
          %v971 = vld [vmem:[%s970] sm:$0xff]
          %v973 = vcombine.high %v971, %v971
          %v975 = vunpack.c.l.s4 1983009808
          %v976 = vunpack.c.0.s8 %v975
          %v977 = vlaneseq
          %v978 = vshrl.u32 %v977, 7
          %v979 = vsub.s32 %v976, %v978
          %v980 = vrot.slane %v971, %v979
          %v982 = vunpack.c.l.s4 1983009808
          %v983 = vunpack.c.0.s8 %v982
          %v984 = vlaneseq
          %v985 = vshrl.u32 %v984, 7
          %v986 = vsub.s32 %v983, %v985
          %v987 = vrot.slane %v973, %v986
          %v988 = vcombine.high %v980, %v980
          %v989 = vcombine.high %v987, %v987
          %v994 = vpack.c.bf16 %v980, %v980
          %v995 = vpack.c.bf16 %v988, %v988
          %v996 = vpack.c.bf16 %v987, %v987
          %v997 = vpack.c.bf16 %v989, %v989
          %v998 = vld [vmem:[#allocation3] sm:$0x3]
          %v999 = vld [vmem:[%s387] sm:$0xf]
          %v1000 = vld [vmem:[%s387 + $0x4] sm:$0xf]
          %v1001 = vld [vmem:[%s387 + $0x8] sm:$0xf]
          %v1002 = vld [vmem:[%s387 + $0xc] sm:$0xf]
          %v1003 = vld [vmem:[%s387 + $0x10] sm:$0xf]
          %v1004 = vld [vmem:[%s387 + $0x14] sm:$0xf]
          %v1005 = vld [vmem:[%s387 + $0x18] sm:$0xf]
          %v1006 = vld [vmem:[%s387 + $0x1c] sm:$0xf]
          %v1007 = vld [vmem:[%s387 + $0x20] sm:$0xf]
          %v1008 = vld [vmem:[%s387 + $0x24] sm:$0xf]
          %v1009 = vld [vmem:[%s387 + $0x28] sm:$0xf]
          %v1010 = vld [vmem:[%s387 + $0x2c] sm:$0xf]
          %v1011 = vld [vmem:[%s387 + $0x30] sm:$0xf]
          %v1012 = vld [vmem:[%s387 + $0x34] sm:$0xf]
          %v1013 = vld [vmem:[%s387 + $0x38] sm:$0xf]
          %v1014 = vld [vmem:[%s387 + $0x3c] sm:$0xf]
          %v1015 = vld [vmem:[%s387 + $0x40] sm:$0xf]
          %v1016 = vld [vmem:[%s387 + $0x44] sm:$0xf]
          %v1017 = vld [vmem:[%s387 + $0x48] sm:$0xf]
          %v1018 = vld [vmem:[%s387 + $0x4c] sm:$0xf]
          %v1019 = vld [vmem:[%s387 + $0x50] sm:$0xf]
          %v1020 = vld [vmem:[%s387 + $0x54] sm:$0xf]
          %v1021 = vld [vmem:[%s387 + $0x58] sm:$0xf]
          %v1022 = vld [vmem:[%s387 + $0x5c] sm:$0xf]
          %v1023 = vld [vmem:[%s387 + $0x60] sm:$0xf]
          %v1024 = vld [vmem:[%s387 + $0x64] sm:$0xf]
          %v1025 = vld [vmem:[%s387 + $0x68] sm:$0xf]
          %v1026 = vld [vmem:[%s387 + $0x6c] sm:$0xf]
          %v1027 = vld [vmem:[%s387 + $0x70] sm:$0xf]
          %v1028 = vld [vmem:[%s387 + $0x74] sm:$0xf]
          %v1029 = vld [vmem:[%s387 + $0x78] sm:$0xf]
          %v1030 = vld [vmem:[%s387 + $0x7c] sm:$0xf]
          %v1031 = vld [vmem:[%s387 + $0x80] sm:$0xf]
          %v1032 = vld [vmem:[%s387 + $0x84] sm:$0xf]
          %v1033 = vld [vmem:[%s387 + $0x88] sm:$0xf]
          %v1034 = vld [vmem:[%s387 + $0x8c] sm:$0xf]
          %v1035 = vld [vmem:[%s387 + $0x90] sm:$0xf]
          %v1036 = vld [vmem:[%s387 + $0x94] sm:$0xf]
          %v1037 = vld [vmem:[%s387 + $0x98] sm:$0xf]
          %v1038 = vld [vmem:[%s387 + $0x9c] sm:$0xf]
          %v1039 = vld [vmem:[%s387 + $0xa0] sm:$0xf]
          %v1040 = vld [vmem:[%s387 + $0xa4] sm:$0xf]
          %v1041 = vld [vmem:[%s387 + $0xa8] sm:$0xf]
          %v1042 = vld [vmem:[%s387 + $0xac] sm:$0xf]
          %v1043 = vld [vmem:[%s387 + $0xb0] sm:$0xf]
          %v1044 = vld [vmem:[%s387 + $0xb4] sm:$0xf]
          %v1045 = vld [vmem:[%s387 + $0xb8] sm:$0xf]
          %v1046 = vld [vmem:[%s387 + $0xbc] sm:$0xf]
          %v1047 = vld [vmem:[%s387 + $0xc0] sm:$0xf]
          %v1048 = vld [vmem:[%s387 + $0xc4] sm:$0xf]
          %v1049 = vld [vmem:[%s387 + $0xc8] sm:$0xf]
          %v1050 = vld [vmem:[%s387 + $0xcc] sm:$0xf]
          %v1051 = vld [vmem:[%s387 + $0xd0] sm:$0xf]
          %v1052 = vld [vmem:[%s387 + $0xd4] sm:$0xf]
          %v1053 = vld [vmem:[%s387 + $0xd8] sm:$0xf]
          %v1054 = vld [vmem:[%s387 + $0xdc] sm:$0xf]
          %v1055 = vld [vmem:[%s387 + $0xe0] sm:$0xf]
          %v1056 = vld [vmem:[%s387 + $0xe4] sm:$0xf]
          %v1057 = vld [vmem:[%s387 + $0xe8] sm:$0xf]
          %v1058 = vld [vmem:[%s387 + $0xec] sm:$0xf]
          %v1059 = vld [vmem:[%s387 + $0xf0] sm:$0xf]
          %v1060 = vld [vmem:[%s387 + $0xf4] sm:$0xf]
          %v1061 = vld [vmem:[%s387 + $0xf8] sm:$0xf]
          %v1062 = vld [vmem:[%s387 + $0xfc] sm:$0xf]
          %v1127 = vunpack.c.l.b16 %v999
          %v1128 = vunpack.c.l.b16 %v1000
          %v1129 = vunpack.c.l.b16 %v1001
          %v1130 = vunpack.c.l.b16 %v1002
          %v1131 = vunpack.c.l.b16 %v1003
          %v1132 = vunpack.c.l.b16 %v1004
          %v1133 = vunpack.c.l.b16 %v1005
          %v1134 = vunpack.c.l.b16 %v1006
          %v1135 = vunpack.c.l.b16 %v1007
          %v1136 = vunpack.c.l.b16 %v1008
          %v1137 = vunpack.c.l.b16 %v1009
          %v1138 = vunpack.c.l.b16 %v1010
          %v1139 = vunpack.c.l.b16 %v1011
          %v1140 = vunpack.c.l.b16 %v1012
          %v1141 = vunpack.c.l.b16 %v1013
          %v1142 = vunpack.c.l.b16 %v1014
          %v1143 = vunpack.c.l.b16 %v1015
          %v1144 = vunpack.c.l.b16 %v1016
          %v1145 = vunpack.c.l.b16 %v1017
          %v1146 = vunpack.c.l.b16 %v1018
          %v1147 = vunpack.c.l.b16 %v1019
          %v1148 = vunpack.c.l.b16 %v1020
          %v1149 = vunpack.c.l.b16 %v1021
          %v1150 = vunpack.c.l.b16 %v1022
          %v1151 = vunpack.c.l.b16 %v1023
          %v1152 = vunpack.c.l.b16 %v1024
          %v1153 = vunpack.c.l.b16 %v1025
          %v1154 = vunpack.c.l.b16 %v1026
          %v1155 = vunpack.c.l.b16 %v1027
          %v1156 = vunpack.c.l.b16 %v1028
          %v1157 = vunpack.c.l.b16 %v1029
          %v1158 = vunpack.c.l.b16 %v1030
          %v1159 = vunpack.c.l.b16 %v1031
          %v1160 = vunpack.c.l.b16 %v1032
          %v1161 = vunpack.c.l.b16 %v1033
          %v1162 = vunpack.c.l.b16 %v1034
          %v1163 = vunpack.c.l.b16 %v1035
          %v1164 = vunpack.c.l.b16 %v1036
          %v1165 = vunpack.c.l.b16 %v1037
          %v1166 = vunpack.c.l.b16 %v1038
          %v1167 = vunpack.c.l.b16 %v1039
          %v1168 = vunpack.c.l.b16 %v1040
          %v1169 = vunpack.c.l.b16 %v1041
          %v1170 = vunpack.c.l.b16 %v1042
          %v1171 = vunpack.c.l.b16 %v1043
          %v1172 = vunpack.c.l.b16 %v1044
          %v1173 = vunpack.c.l.b16 %v1045
          %v1174 = vunpack.c.l.b16 %v1046
          %v1175 = vunpack.c.l.b16 %v1047
          %v1176 = vunpack.c.l.b16 %v1048
          %v1177 = vunpack.c.l.b16 %v1049
          %v1178 = vunpack.c.l.b16 %v1050
          %v1179 = vunpack.c.l.b16 %v1051
          %v1180 = vunpack.c.l.b16 %v1052
          %v1181 = vunpack.c.l.b16 %v1053
          %v1182 = vunpack.c.l.b16 %v1054
          %v1183 = vunpack.c.l.b16 %v1055
          %v1184 = vunpack.c.l.b16 %v1056
          %v1185 = vunpack.c.l.b16 %v1057
          %v1186 = vunpack.c.l.b16 %v1058
          %v1187 = vunpack.c.l.b16 %v1059
          %v1188 = vunpack.c.l.b16 %v1060
          %v1189 = vunpack.c.l.b16 %v1061
          %v1190 = vunpack.c.l.b16 %v1062
          %v1191 = vpack.c.b16 %v1128, %v1127
          %v1192 = vpack.c.b16 %v1130, %v1129
          %v1193 = vpack.c.b16 %v1132, %v1131
          %v1194 = vpack.c.b16 %v1134, %v1133
          %v1195 = vpack.c.b16 %v1136, %v1135
          %v1196 = vpack.c.b16 %v1138, %v1137
          %v1197 = vpack.c.b16 %v1140, %v1139
          %v1198 = vpack.c.b16 %v1142, %v1141
          %v1199 = vpack.c.b16 %v1144, %v1143
          %v1200 = vpack.c.b16 %v1146, %v1145
          %v1201 = vpack.c.b16 %v1148, %v1147
          %v1202 = vpack.c.b16 %v1150, %v1149
          %v1203 = vpack.c.b16 %v1152, %v1151
          %v1204 = vpack.c.b16 %v1154, %v1153
          %v1205 = vpack.c.b16 %v1156, %v1155
          %v1206 = vpack.c.b16 %v1158, %v1157
          %v1207 = vpack.c.b16 %v1160, %v1159
          %v1208 = vpack.c.b16 %v1162, %v1161
          %v1209 = vpack.c.b16 %v1164, %v1163
          %v1210 = vpack.c.b16 %v1166, %v1165
          %v1211 = vpack.c.b16 %v1168, %v1167
          %v1212 = vpack.c.b16 %v1170, %v1169
          %v1213 = vpack.c.b16 %v1172, %v1171
          %v1214 = vpack.c.b16 %v1174, %v1173
          %v1215 = vpack.c.b16 %v1176, %v1175
          %v1216 = vpack.c.b16 %v1178, %v1177
          %v1217 = vpack.c.b16 %v1180, %v1179
          %v1218 = vpack.c.b16 %v1182, %v1181
          %v1219 = vpack.c.b16 %v1184, %v1183
          %v1220 = vpack.c.b16 %v1186, %v1185
          %v1221 = vpack.c.b16 %v1188, %v1187
          %v1222 = vpack.c.b16 %v1190, %v1189
          %1255 = vmatprep.subr.bf16.mxu0 0
          %1256 = vmatpush1.bf16.msra.mxu0 %v1198
          %1257 = vmatprep.subr.bf16.mxu0 0
          %1258 = vmatpush1.bf16.msra.mxu0 %v1197
          %1259 = vmatprep.subr.bf16.mxu0 0
          %1260 = vmatpush1.bf16.msra.mxu0 %v1196
          %1261 = vmatprep.subr.bf16.mxu0 0
          %1262 = vmatpush1.bf16.msra.mxu0 %v1195
          %1263 = vmatprep.subr.bf16.mxu0 0
          %1264 = vmatpush1.bf16.msra.mxu0 %v1194
          %1265 = vmatprep.subr.bf16.mxu0 0
          %1266 = vmatpush1.bf16.msra.mxu0 %v1193
          %1267 = vmatprep.subr.bf16.mxu0 0
          %1268 = vmatpush1.bf16.msra.mxu0 %v1192
          %1269 = vmatprep.subr.bf16.mxu0 0
          %1270 = vmatpush1.bf16.msra.mxu0 %v1191
          %1271 = vmatprep.subr.bf16.mxu0 0
          %1272 = vmatpush2.bf16.msra.mxu0 %v1206
          %1273 = vmatprep.subr.bf16.mxu0 0
          %1274 = vmatpush2.bf16.msra.mxu0 %v1205
          %1275 = vmatprep.subr.bf16.mxu0 0
          %1276 = vmatpush2.bf16.msra.mxu0 %v1204
          %1277 = vmatprep.subr.bf16.mxu0 0
          %1278 = vmatpush2.bf16.msra.mxu0 %v1203
          %1279 = vmatprep.subr.bf16.mxu0 0
          %1280 = vmatpush2.bf16.msra.mxu0 %v1202
          %1281 = vmatprep.subr.bf16.mxu0 0
          %1282 = vmatpush2.bf16.msra.mxu0 %v1201
          %1283 = vmatprep.subr.bf16.mxu0 0
          %1284 = vmatpush2.bf16.msra.mxu0 %v1200
          %1285 = vmatprep.subr.bf16.mxu0 0
          %1286 = vmatpush2.bf16.msra.mxu0 %v1199
          %1287 = vmatprep.mubr.bf16.mxu0 %v995
          %1288 = vmatmul.mubr.bf16.gmra.mxu0 %v994
          %v1289 = vpop.f32.mrf.mxu0
          %v1290 = vadd.f32 0.0, %v1289
          %v1291 = vpop.f32.mrf.mxu0
          %v1292 = vpop.f32.mrf.mxu0
          %v1293 = vpop.f32.mrf.mxu0
          %1294 = vdwg.mxu0
          %1295 = vmatprep.subr.bf16.mxu0 0
          %1296 = vmatpush1.bf16.msra.mxu0 %v1214
          %1297 = vmatprep.subr.bf16.mxu0 0
          %1298 = vmatpush1.bf16.msra.mxu0 %v1213
          %1299 = vmatprep.subr.bf16.mxu0 0
          %1300 = vmatpush1.bf16.msra.mxu0 %v1212
          %1301 = vmatprep.subr.bf16.mxu0 0
          %1302 = vmatpush1.bf16.msra.mxu0 %v1211
          %1303 = vmatprep.subr.bf16.mxu0 0
          %1304 = vmatpush1.bf16.msra.mxu0 %v1210
          %1305 = vmatprep.subr.bf16.mxu0 0
          %1306 = vmatpush1.bf16.msra.mxu0 %v1209
          %1307 = vmatprep.subr.bf16.mxu0 0
          %1308 = vmatpush1.bf16.msra.mxu0 %v1208
          %1309 = vmatprep.subr.bf16.mxu0 0
          %1310 = vmatpush1.bf16.msra.mxu0 %v1207
          %1311 = vmatprep.subr.bf16.mxu0 0
          %1312 = vmatpush2.bf16.msra.mxu0 %v1222
          %1313 = vmatprep.subr.bf16.mxu0 0
          %1314 = vmatpush2.bf16.msra.mxu0 %v1221
          %1315 = vmatprep.subr.bf16.mxu0 0
          %1316 = vmatpush2.bf16.msra.mxu0 %v1220
          %1317 = vmatprep.subr.bf16.mxu0 0
          %1318 = vmatpush2.bf16.msra.mxu0 %v1219
          %1319 = vmatprep.subr.bf16.mxu0 0
          %1320 = vmatpush2.bf16.msra.mxu0 %v1218
          %1321 = vmatprep.subr.bf16.mxu0 0
          %1322 = vmatpush2.bf16.msra.mxu0 %v1217
          %1323 = vmatprep.subr.bf16.mxu0 0
          %1324 = vmatpush2.bf16.msra.mxu0 %v1216
          %1325 = vmatprep.subr.bf16.mxu0 0
          %1326 = vmatpush2.bf16.msra.mxu0 %v1215
          %1327 = vmatprep.mubr.bf16.mxu0 %v997
          %1328 = vmatmul.mubr.bf16.gmra.mxu0 %v996
          %v1329 = vpop.f32.mrf.mxu0
          %v1330 = vadd.f32 %v1290, %v1329
          %v1331 = vpop.f32.mrf.mxu0
          %v1332 = vpop.f32.mrf.mxu0
          %v1333 = vpop.f32.mrf.mxu0
          %1334 = vdwg.mxu0
          %v1335 = vadd.f32 %v998, %v1330
          %1336 = vst [vmem:[#allocation3] sm:$0x3] %v1335
        $region84: #{tpu_custom_call.1} parent=43 // pred_fallthru
          _
        %p1337 = pnand %p963, %p445
        %p1338 = pneg %p1337
        // Predicated region
        $region85: #{tpu_custom_call.1} parent=43 // pred_check
          _
        $region86: #{tpu_custom_call.1} parent=43 // pred_check_branch
          %1340 = sbr.rel (%p1337) target = $region88
        $region87: #{tpu_custom_call.1} parent=43 // pred_region
          %v1341 = vld [vmem:[#allocation3] sm:$0x3]
          %v1342 = vld [vmem:[%s438] sm:$0x1]
          %v1343 = vld [vmem:[%s438 + $0x1] sm:$0x1]
          %vm1344 = vcmask 1041408
          %v1345 = vsel %vm1344, %v1341, 0.0
          %1346 = vadd.xlane.f32.xlu0 %v1345
          %v1347 = vpop.xlane.xlu0 %1346
          %v1348 = vrcp.pop 128.0
          %v1349 = vmul.f32 %v1347, %v1348
          %v1350 = vsub.f32 %v1341, %v1349
          %v1351 = vmul.f32 %v1350, %v1350
          %v1352 = vsel %vm1344, %v1351, 0.0
          %1353 = vadd.xlane.f32.xlu0 %v1352
          %v1354 = vpop.xlane.xlu0 %1353
          %v1355 = vmul.f32 %v1354, %v1348
          %v1356 = vadd.f32 %v1355, 1e-05
          %v1357 = vrsqrt.pop %v1356
          %v1358 = vmul.f32 %v1350, %v1357
          %v1359 = vlaneseq
          %v1360 = vshrl.u32 %v1359, 7
          %v1361 = vsub.s32 0, %v1360
          %v1362 = vrot.slane %v1342, %v1361
          %v1363 = vmul.f32 %v1358, %v1362
          %v1364 = vlaneseq
          %v1365 = vshrl.u32 %v1364, 7
          %v1366 = vsub.s32 0, %v1365
          %v1367 = vrot.slane %v1343, %v1366
          %v1368 = vadd.f32 %v1363, %v1367
          %v1369 = vld [vmem:[#allocation14] sm:$0x3]
          %v1370 = vadd.f32 %v1368, %v1369
          %1371 = vst [vmem:[#allocation14] sm:$0x3] %v1370
        $region88: #{tpu_custom_call.1} parent=43 // pred_fallthru
          _
        // Predicated region
        $region89: #{tpu_custom_call.1} parent=43 // pred_check
          %p1372 = pneg %p218
        $region90: #{tpu_custom_call.1} parent=43 // pred_check_branch
          %1374 = sbr.rel (%p1372) target = $region92
        $region91: #{tpu_custom_call.1} parent=43 // pred_region
          %s1376 = ssub.s32 32, 32
          %1377 = vsyncadd [#allocation7], %s1376
          %s1379 = sshll.u32 [#allocation14], 4
          %s1380 = int_to_ptr.vmem [resolvable:$true] %s1379
          %1382 = dma.vmem_to_hbm [thread:$0]  %s1380, 32, %s6, [#allocation7]
        $region92: #{tpu_custom_call.1} parent=43 // pred_fallthru
          _
        // Predicated region
        $region93: #{tpu_custom_call.1} parent=43 // pred_check
          %p1383 = pneg %p218
        $region94: #{tpu_custom_call.1} parent=43 // pred_check_branch
          %1385 = sbr.rel (%p1383) target = $region96
        $region95: #{tpu_custom_call.1} parent=43 // pred_region
          %1386 = dma.done [#allocation7], 32
        $region96: #{tpu_custom_call.1} parent=43 // pred_fallthru
          _
      $region44: #{tpu_custom_call.1} parent=5 // pred_fallthru
        _
      %p1387 = scmp.le.s32.totalorder 2, %s20
      // Predicated region
      $region97: #{tpu_custom_call.1} parent=5 // pred_check
        %p1388 = pneg %p1387
      $region98: #{tpu_custom_call.1} parent=5 // pred_check_branch
        %1390 = sbr.rel (%p1388) target = $region100
      $region99: #{tpu_custom_call.1} parent=5 // pred_region
        %s1391 = ssub.s32 %s20, 2
      $region100: #{tpu_custom_call.1} parent=5 // pred_fallthru
        _
    $region6: #{tpu_custom_call.1} parent=1 // loop_footer
      %s24 = sadd.s32 1, %s20
    $region7: #{tpu_custom_call.1} parent=1 // loop_footer_branch
      %19 = sbr.rel target = $region3
    $region8: #{tpu_custom_call.1} parent=1 // loop_exit
      _
    %1392 = vsyncpa [#allocation6], 1
    %s1393 = scalar_lea.sflag [#allocation6], 1
    %1394 = vsyncpa %s1393, 1
    %1395 = vsyncpa [#allocation9], 1
    %s1396 = scalar_lea.sflag [#allocation9], 1
    %1397 = vsyncpa %s1396, 1
    %1398 = vsyncpa [#allocation12], 1
    %s1399 = scalar_lea.sflag [#allocation12], 1
    %1400 = vsyncpa %s1399, 1
    %1401 = vsyncpa [#allocation7], 1
    %s1402 = scalar_lea.sflag [#allocation7], 1
    %1403 = vsyncpa %s1402, 1

</llo_original>
